<compile_context>
chip_gen: v6e
topology: v6e:2x2x1
jax: 0.10.0
libtpu: 0.0.40
codegen_flags: <defaults>
</compile_context>

<pallas_src>
import math
import jax
import jax.numpy as jnp
from jax import lax
from jax.experimental import pallas as pl
from jax.experimental.pallas import tpu as pltpu

D_MODEL = 32
NHEAD = 4
HEAD_DIM = D_MODEL // NHEAD
LN_EPS = 1e-5


def _num_tensorcores() -> int:
    """Best-effort TensorCore count (2 on v7x, 1 on v5e/v6e). Falls back to 1."""
    try:
        info = pltpu.get_tpu_info()
    except Exception:
        return 1
    for name in ("num_cores", "cores_per_chip", "num_tensorcores", "core_count"):
        n = getattr(info, name, None)
        if isinstance(n, int) and n > 0:
            return n
    return 1


def _cross_attn_kernel(tgt_ref, mem_ref, qpos_ref, pos_ref,
                       wqkv_ref, bqkv_ref, wo_ref, bo_ref,
                       ln_w_ref, ln_b_ref, out_ref):
    bb, Lq, E = tgt_ref.shape
    Lk = mem_ref.shape[1]
    nq, nk = bb * Lq, bb * Lk

    # (bb, L, E) -> (bb*L, E): leading-dim collapse; tile-aligned (L % 8 == 0).
    tgt = tgt_ref[...].reshape(nq, E)
    mem = mem_ref[...].reshape(nk, E)
    q_in = tgt + qpos_ref[...].reshape(nq, E)     # with_pos_embed(tgt, query_pos)
    k_in = mem + pos_ref[...].reshape(nk, E)      # with_pos_embed(memory, pos)

    # Fused q/k/v projection: one (nq+2nk, E) @ (E, 3E) MXU push, one bias add.
    # Weights are already transposed on the host.
    lhs = jnp.concatenate([q_in, k_in, mem], axis=0)
    proj = jnp.dot(lhs, wqkv_ref[...], preferred_element_type=jnp.float32)
    proj = proj + bqkv_ref[...]

    scale = 1.0 / math.sqrt(HEAD_DIM)
    q = proj[:nq, 0:E] * scale
    k = proj[nq:nq + nk, E:2 * E]
    v = proj[nq + nk:, 2 * E:3 * E]

    # Head split without splitting the lane (E) dim in place:
    # minor transpose -> sublane-tile-aligned view split -> minor transpose back.
    #   (bb*L, E) -> (bb, L, E) -> (bb, E, L) -> (bb*H, Dh, L) -> (bb*H, L, Dh)
    def split_heads(x, L):
        xt = jnp.transpose(x.reshape(bb, L, E), (0, 2, 1))
        xt = xt.reshape(bb * NHEAD, HEAD_DIM, L)
        return jnp.transpose(xt, (0, 2, 1))

    qh = split_heads(q, Lq)          # (g, Lq, Dh), g = bb*NHEAD
    kh = split_heads(k, Lk)          # (g, Lk, Dh)
    vh = split_heads(v, Lk)          # (g, Lk, Dh)

    # Single batched contraction over all (batch, head) pairs.
    s = jnp.einsum('gqd,gkd->gqk', qh, kh, preferred_element_type=jnp.float32)
    s = s - jnp.max(s, axis=-1, keepdims=True)
    p = jnp.exp(s)
    p = p * pl.reciprocal(jnp.sum(p, axis=-1, keepdims=True), approx=True)
    o = jnp.einsum('gqk,gkd->gqd', p, vh, preferred_element_type=jnp.float32)

    # Merge heads back: (g, Lq, Dh) -> (bb, E, Lq) -> (bb, Lq, E) -> (nq, E).
    oT = jnp.transpose(o, (0, 2, 1)).reshape(bb, E, Lq)
    attn = jnp.transpose(oT, (0, 2, 1)).reshape(nq, E)

    # Output projection (pre-transposed weight), residual (dropout p=0 -> id),
    # LayerNorm over the last dim.
    attn = jnp.dot(attn, wo_ref[...], preferred_element_type=jnp.float32) + bo_ref[...]
    x = tgt + attn
    mu = jnp.mean(x, axis=-1, keepdims=True)
    var = jnp.mean(jnp.square(x - mu), axis=-1, keepdims=True)
    y = (x - mu) * lax.rsqrt(var + LN_EPS)
    y = y * ln_w_ref[...] + ln_b_ref[...]
    out_ref[...] = y.reshape(bb, Lq, E).astype(out_ref.dtype)


def cross_attention_layer(tgt, memory, query_pos, pos, params):
    """tgt/query_pos: (Lq, B, E); memory/pos: (Lk, B, E). Returns (Lq, B, E)."""
    Lq, B, E = tgt.shape
    Lk = memory.shape[0]

    # Batch-first layout for the kernel (lane-dense last dim = E).
    # TODO(synk): BlockSpec index_maps cannot permute dims and a (Lq, 1, E)
    # block over the native (L, B, E) layout breaks the (8,128) block rule, so
    # these tiny layout transposes remain as XLA ops.
    tgt_b = jnp.transpose(tgt, (1, 0, 2))
    mem_b = jnp.transpose(memory, (1, 0, 2))
    qpos_b = jnp.transpose(query_pos, (1, 0, 2))
    pos_b = jnp.transpose(pos, (1, 0, 2))

    # Host-side weight prep: transpose + fuse the three input projections.
    wqkv = jnp.concatenate([params["wq"].T, params["wk"].T, params["wv"].T], axis=1)  # (E, 3E)
    bqkv = jnp.concatenate([params["bq"], params["bk"], params["bv"]], axis=1)        # (1, 3E)
    wo_t = params["wo"].T

    # Fold the whole batch into one grid step on single-TC chips (v5e/v6e);
    # split it across TensorCores when more than one is available (v7x).
    cores = _num_tensorcores()
    if cores > 1 and B % cores == 0:
        bb = B // cores
    else:
        bb = B
    grid = (B // bb,)

    seq_q = pl.BlockSpec((bb, Lq, E), lambda i: (i, 0, 0))
    seq_k = pl.BlockSpec((bb, Lk, E), lambda i: (i, 0, 0))

    def full(shape):
        return pl.BlockSpec(shape, lambda i: (0,) * len(shape))

    out_b = pl.pallas_call(
        _cross_attn_kernel,
        out_shape=jax.ShapeDtypeStruct((B, Lq, E), tgt.dtype),
        grid=grid,
        in_specs=[seq_q, seq_k, seq_q, seq_k,
                  full((E, 3 * E)), full((1, 3 * E)),
                  full((E, E)), full((1, E)),
                  full((1, E)), full((1, E))],
        out_specs=seq_q,
        compiler_params=pltpu.CompilerParams(dimension_semantics=("parallel",)),
    )(tgt_b, mem_b, qpos_b, pos_b, wqkv, bqkv, wo_t,
      params["bo"], params["ln_w"], params["ln_b"])

    return jnp.transpose(out_b, (1, 0, 2))


def reference(tgt, memory, query_pos, pos, params):
    """Pure-JAX reference of forward_post for validation."""
    q_in = tgt + query_pos
    k_in = memory + pos
    q = q_in @ params["wq"].T + params["bq"][0]
    k = k_in @ params["wk"].T + params["bk"][0]
    v = memory @ params["wv"].T + params["bv"][0]
    Lq, B, E = q.shape
    Lk = k.shape[0]

    def split(x, L):
        return jnp.transpose(x.reshape(L, B, NHEAD, HEAD_DIM), (1, 2, 0, 3))

    qh, kh, vh = split(q, Lq), split(k, Lk), split(v, Lk)
    scores = jnp.einsum("bhqd,bhkd->bhqk", qh, kh) / math.sqrt(HEAD_DIM)
    p = jax.nn.softmax(scores, axis=-1)
    o = jnp.einsum("bhqk,bhkd->bhqd", p, vh)
    o = jnp.transpose(o, (2, 0, 1, 3)).reshape(Lq, B, E)
    attn = o @ params["wo"].T + params["bo"][0]
    x = tgt + attn
    mean = jnp.mean(x, axis=-1, keepdims=True)
    var = jnp.mean((x - mean) ** 2, axis=-1, keepdims=True)
    return (x - mean) / jnp.sqrt(var + LN_EPS) * params["ln_w"][0] + params["ln_b"][0]


if __name__ == "__main__":
    key = jax.random.PRNGKey(0)
    Lq, Lk, B, E = 8, 16, 2, D_MODEL

    ks = jax.random.split(key, 10)
    tgt = jax.random.normal(ks[0], (Lq, B, E), jnp.float32)
    memory = jax.random.normal(ks[1], (Lk, B, E), jnp.float32)
    query_pos = jax.random.normal(ks[2], (Lq, B, E), jnp.float32)
    pos = jax.random.normal(ks[3], (Lk, B, E), jnp.float32)

    # Deterministic parameter init (shapes from nn.MultiheadAttention / LayerNorm).
    in_proj_w = jax.random.normal(ks[4], (3 * E, E), jnp.float32) * (1.0 / math.sqrt(E))
    in_proj_b = jax.random.normal(ks[5], (3 * E,), jnp.float32) * 0.02
    out_proj_w = jax.random.normal(ks[6], (E, E), jnp.float32) * (1.0 / math.sqrt(E))
    out_proj_b = jax.random.normal(ks[7], (E,), jnp.float32) * 0.02

    params = {
        "wq": in_proj_w[0 * E:1 * E],
        "wk": in_proj_w[1 * E:2 * E],
        "wv": in_proj_w[2 * E:3 * E],
        "bq": in_proj_b[0 * E:1 * E].reshape(1, E),
        "bk": in_proj_b[1 * E:2 * E].reshape(1, E),
        "bv": in_proj_b[2 * E:3 * E].reshape(1, E),
        "wo": out_proj_w,
        "bo": out_proj_b.reshape(1, E),
        "ln_w": jnp.ones((1, E), jnp.float32),
        "ln_b": jnp.zeros((1, E), jnp.float32),
    }

    out = cross_attention_layer(tgt, memory, query_pos, pos, params)
    out = jax.block_until_ready(out)

    ref = reference(tgt, memory, query_pos, pos, params)
    assert out.shape == (Lq, B, E)
    # Tolerance accounts for the approximate (EUP) reciprocal in the softmax.
    assert jnp.allclose(out, ref, atol=5e-3, rtol=5e-3), float(jnp.max(jnp.abs(out - ref)))

    print("KERNEL_OK")
</pallas_src>

<mosaic_0001>
module attributes {stable_mosaic.version = 11 : i64} {
  func.func @_cross_attn_kernel(%arg0: i32, %arg1: memref<2x8x32xf32, #tpu.memory_space<vmem>>, %arg2: memref<2x16x32xf32, #tpu.memory_space<vmem>>, %arg3: memref<2x8x32xf32, #tpu.memory_space<vmem>>, %arg4: memref<2x16x32xf32, #tpu.memory_space<vmem>>, %arg5: memref<32x96xf32, #tpu.memory_space<vmem>>, %arg6: memref<1x96xf32, #tpu.memory_space<vmem>>, %arg7: memref<32x32xf32, #tpu.memory_space<vmem>>, %arg8: memref<1x32xf32, #tpu.memory_space<vmem>>, %arg9: memref<1x32xf32, #tpu.memory_space<vmem>>, %arg10: memref<1x32xf32, #tpu.memory_space<vmem>>, %arg11: memref<2x8x32xf32, #tpu.memory_space<vmem>>) attributes {dimension_semantics = [#tpu.dimension_semantics<parallel>], iteration_bounds = array<i64: 1>, scalar_prefetch = 0 : i64, scratch_operands = 0 : i64, tpu.core_type = #tpu.core_type<tc>, window_params = [{transform_indices = @transform_0, window_bounds = array<i64: 2, 8, 32>}, {transform_indices = @transform_1, window_bounds = array<i64: 2, 16, 32>}, {transform_indices = @transform_2, window_bounds = array<i64: 2, 8, 32>}, {transform_indices = @transform_3, window_bounds = array<i64: 2, 16, 32>}, {pipeline_mode = #tpu.pipeline_mode<synchronous>, transform_indices = @transform_4, window_bounds = array<i64: 32, 96>}, {pipeline_mode = #tpu.pipeline_mode<synchronous>, transform_indices = @transform_5, window_bounds = array<i64: 1, 96>}, {pipeline_mode = #tpu.pipeline_mode<synchronous>, transform_indices = @transform_6, window_bounds = array<i64: 32, 32>}, {pipeline_mode = #tpu.pipeline_mode<synchronous>, transform_indices = @transform_7, window_bounds = array<i64: 1, 32>}, {pipeline_mode = #tpu.pipeline_mode<synchronous>, transform_indices = @transform_8, window_bounds = array<i64: 1, 32>}, {pipeline_mode = #tpu.pipeline_mode<synchronous>, transform_indices = @transform_9, window_bounds = array<i64: 1, 32>}, {transform_indices = @transform_10, window_bounds = array<i64: 2, 8, 32>}]} {
    %c0 = arith.constant 0 : index
    %c0_0 = arith.constant 0 : index
    %c0_1 = arith.constant 0 : index
    %0 = vector.load %arg1[%c0, %c0_0, %c0_1] : memref<2x8x32xf32, #tpu.memory_space<vmem>>, vector<2x8x32xf32>
    %1 = vector.shape_cast %0 : vector<2x8x32xf32> to vector<16x32xf32>
    %c0_2 = arith.constant 0 : index
    %c0_3 = arith.constant 0 : index
    %c0_4 = arith.constant 0 : index
    %2 = vector.load %arg2[%c0_2, %c0_3, %c0_4] : memref<2x16x32xf32, #tpu.memory_space<vmem>>, vector<2x16x32xf32>
    %3 = vector.shape_cast %2 : vector<2x16x32xf32> to vector<32x32xf32>
    %c0_5 = arith.constant 0 : index
    %c0_6 = arith.constant 0 : index
    %c0_7 = arith.constant 0 : index
    %4 = vector.load %arg3[%c0_5, %c0_6, %c0_7] : memref<2x8x32xf32, #tpu.memory_space<vmem>>, vector<2x8x32xf32>
    %5 = vector.shape_cast %4 : vector<2x8x32xf32> to vector<16x32xf32>
    %6 = arith.addf %1, %5 : vector<16x32xf32>
    %c0_8 = arith.constant 0 : index
    %c0_9 = arith.constant 0 : index
    %c0_10 = arith.constant 0 : index
    %7 = vector.load %arg4[%c0_8, %c0_9, %c0_10] : memref<2x16x32xf32, #tpu.memory_space<vmem>>, vector<2x16x32xf32>
    %8 = vector.shape_cast %7 : vector<2x16x32xf32> to vector<32x32xf32>
    %9 = arith.addf %3, %8 : vector<32x32xf32>
    %10 = tpu.concatenate %6, %9, %3 in 0 : vector<16x32xf32>, vector<32x32xf32>, vector<32x32xf32> -> vector<80x32xf32>
    %c0_11 = arith.constant 0 : index
    %c0_12 = arith.constant 0 : index
    %11 = vector.load %arg5[%c0_11, %c0_12] : memref<32x96xf32, #tpu.memory_space<vmem>>, vector<32x96xf32>
    %cst = arith.constant dense<0.000000e+00> : vector<80x96xf32>
    %12 = tpu.matmul %10, %11, %cst {dimension_numbers = #tpu.dot_dimension_numbers<[1], [0], [0], [1], [0, 0, 1, 1], [], []>} : vector<80x32xf32>, vector<32x96xf32>, vector<80x96xf32> -> vector<80x96xf32>
    %c0_13 = arith.constant 0 : index
    %c0_14 = arith.constant 0 : index
    %13 = vector.load %arg6[%c0_13, %c0_14] : memref<1x96xf32, #tpu.memory_space<vmem>>, vector<1x96xf32>
    %14 = vector.broadcast %13 : vector<1x96xf32> to vector<80x96xf32>
    %15 = arith.addf %12, %14 : vector<80x96xf32>
    %16 = vector.extract_strided_slice %15 {offsets = [0, 0], sizes = [16, 32], strides = [1, 1]} : vector<80x96xf32> to vector<16x32xf32>
    %cst_15 = arith.constant 0.353553385 : f32
    %17 = vector.broadcast %cst_15 : f32 to vector<16x32xf32>
    %18 = arith.mulf %16, %17 : vector<16x32xf32>
    %19 = vector.extract_strided_slice %15 {offsets = [16, 32], sizes = [32, 32], strides = [1, 1]} : vector<80x96xf32> to vector<32x32xf32>
    %20 = vector.extract_strided_slice %15 {offsets = [48, 64], sizes = [32, 32], strides = [1, 1]} : vector<80x96xf32> to vector<32x32xf32>
    %21 = vector.shape_cast %18 : vector<16x32xf32> to vector<2x8x32xf32>
    %22 = tpu.transpose %21, [0, 2, 1] : vector<2x8x32xf32> -> vector<2x32x8xf32>
    %23 = vector.shape_cast %22 : vector<2x32x8xf32> to vector<8x8x8xf32>
    %24 = tpu.transpose %23, [0, 2, 1] : vector<8x8x8xf32> -> vector<8x8x8xf32>
    %25 = vector.shape_cast %19 : vector<32x32xf32> to vector<2x16x32xf32>
    %26 = tpu.transpose %25, [0, 2, 1] : vector<2x16x32xf32> -> vector<2x32x16xf32>
    %27 = vector.shape_cast %26 : vector<2x32x16xf32> to vector<8x8x16xf32>
    %28 = tpu.transpose %27, [0, 2, 1] : vector<8x8x16xf32> -> vector<8x16x8xf32>
    %29 = vector.shape_cast %20 : vector<32x32xf32> to vector<2x16x32xf32>
    %30 = tpu.transpose %29, [0, 2, 1] : vector<2x16x32xf32> -> vector<2x32x16xf32>
    %31 = vector.shape_cast %30 : vector<2x32x16xf32> to vector<8x8x16xf32>
    %32 = tpu.transpose %31, [0, 2, 1] : vector<8x8x16xf32> -> vector<8x16x8xf32>
    "tpu.trace_start"() <{level = 10 : i32, message = "gqd,gkd->gqk"}> : () -> ()
    %cst_16 = arith.constant dense<0.000000e+00> : vector<8x8x16xf32>
    %33 = tpu.matmul %24, %28, %cst_16 {dimension_numbers = #tpu.dot_dimension_numbers<[2], [2], [1], [1], [0, 0, 0, 1, 1, 1], [0], [0]>} : vector<8x8x8xf32>, vector<8x16x8xf32>, vector<8x8x16xf32> -> vector<8x8x16xf32>
    "tpu.trace_stop"() : () -> ()
    %cst_17 = arith.constant dense<0xFF800000> : vector<8x8xf32>
    %34 = vector.multi_reduction <maximumf>, %33, %cst_17 [2] : vector<8x8x16xf32> to vector<8x8xf32>
    %35 = vector.shape_cast %34 : vector<8x8xf32> to vector<8x8x1xf32>
    %36 = vector.broadcast %35 : vector<8x8x1xf32> to vector<8x8x16xf32>
    %37 = arith.subf %33, %36 : vector<8x8x16xf32>
    %38 = math.exp %37 : vector<8x8x16xf32>
    %cst_18 = arith.constant dense<0.000000e+00> : vector<8x8xf32>
    %39 = vector.multi_reduction <add>, %38, %cst_18 [2] : vector<8x8x16xf32> to vector<8x8xf32>
    %40 = vector.shape_cast %39 : vector<8x8xf32> to vector<8x8x1xf32>
    %41 = tpu.reciprocal %40 {approx = true} : vector<8x8x1xf32> -> vector<8x8x1xf32>
    %42 = vector.broadcast %41 : vector<8x8x1xf32> to vector<8x8x16xf32>
    %43 = arith.mulf %38, %42 : vector<8x8x16xf32>
    "tpu.trace_start"() <{level = 10 : i32, message = "gqk,gkd->gqd"}> : () -> ()
    %cst_19 = arith.constant dense<0.000000e+00> : vector<8x8x8xf32>
    %44 = tpu.matmul %43, %32, %cst_19 {dimension_numbers = #tpu.dot_dimension_numbers<[2], [1], [1], [2], [0, 0, 0, 1, 1, 2], [0], [0]>} : vector<8x8x16xf32>, vector<8x16x8xf32>, vector<8x8x8xf32> -> vector<8x8x8xf32>
    "tpu.trace_stop"() : () -> ()
    %45 = tpu.transpose %44, [0, 2, 1] : vector<8x8x8xf32> -> vector<8x8x8xf32>
    %46 = vector.shape_cast %45 : vector<8x8x8xf32> to vector<2x32x8xf32>
    %47 = tpu.transpose %46, [0, 2, 1] : vector<2x32x8xf32> -> vector<2x8x32xf32>
    %48 = vector.shape_cast %47 : vector<2x8x32xf32> to vector<16x32xf32>
    %c0_20 = arith.constant 0 : index
    %c0_21 = arith.constant 0 : index
    %49 = vector.load %arg7[%c0_20, %c0_21] : memref<32x32xf32, #tpu.memory_space<vmem>>, vector<32x32xf32>
    %cst_22 = arith.constant dense<0.000000e+00> : vector<16x32xf32>
    %50 = tpu.matmul %48, %49, %cst_22 {dimension_numbers = #tpu.dot_dimension_numbers<[1], [0], [0], [1], [0, 0, 1, 1], [], []>} : vector<16x32xf32>, vector<32x32xf32>, vector<16x32xf32> -> vector<16x32xf32>
    %c0_23 = arith.constant 0 : index
    %c0_24 = arith.constant 0 : index
    %51 = vector.load %arg8[%c0_23, %c0_24] : memref<1x32xf32, #tpu.memory_space<vmem>>, vector<1x32xf32>
    %52 = vector.broadcast %51 : vector<1x32xf32> to vector<16x32xf32>
    %53 = arith.addf %50, %52 : vector<16x32xf32>
    %54 = arith.addf %1, %53 : vector<16x32xf32>
    %cst_25 = arith.constant dense<0.000000e+00> : vector<16xf32>
    %55 = vector.multi_reduction <add>, %54, %cst_25 [1] : vector<16x32xf32> to vector<16xf32>
    %56 = vector.shape_cast %55 : vector<16xf32> to vector<16x1xf32>
    %cst_26 = arith.constant 3.200000e+01 : f32
    %57 = vector.broadcast %cst_26 : f32 to vector<16x1xf32>
    %58 = arith.divf %56, %57 : vector<16x1xf32>
    %59 = vector.broadcast %58 : vector<16x1xf32> to vector<16x32xf32>
    %60 = arith.subf %54, %59 : vector<16x32xf32>
    %61 = arith.mulf %60, %60 : vector<16x32xf32>
    %cst_27 = arith.constant dense<0.000000e+00> : vector<16xf32>
    %62 = vector.multi_reduction <add>, %61, %cst_27 [1] : vector<16x32xf32> to vector<16xf32>
    %63 = vector.shape_cast %62 : vector<16xf32> to vector<16x1xf32>
    %cst_28 = arith.constant 3.200000e+01 : f32
    %64 = vector.broadcast %cst_28 : f32 to vector<16x1xf32>
    %65 = arith.divf %63, %64 : vector<16x1xf32>
    %66 = vector.broadcast %58 : vector<16x1xf32> to vector<16x32xf32>
    %67 = arith.subf %54, %66 : vector<16x32xf32>
    %cst_29 = arith.constant 9.99999974E-6 : f32
    %68 = vector.broadcast %cst_29 : f32 to vector<16x1xf32>
    %69 = arith.addf %65, %68 : vector<16x1xf32>
    %70 = math.rsqrt %69 : vector<16x1xf32>
    %71 = vector.broadcast %70 : vector<16x1xf32> to vector<16x32xf32>
    %72 = arith.mulf %67, %71 : vector<16x32xf32>
    %c0_30 = arith.constant 0 : index
    %c0_31 = arith.constant 0 : index
    %73 = vector.load %arg9[%c0_30, %c0_31] : memref<1x32xf32, #tpu.memory_space<vmem>>, vector<1x32xf32>
    %74 = vector.broadcast %73 : vector<1x32xf32> to vector<16x32xf32>
    %75 = arith.mulf %72, %74 : vector<16x32xf32>
    %c0_32 = arith.constant 0 : index
    %c0_33 = arith.constant 0 : index
    %76 = vector.load %arg10[%c0_32, %c0_33] : memref<1x32xf32, #tpu.memory_space<vmem>>, vector<1x32xf32>
    %77 = vector.broadcast %76 : vector<1x32xf32> to vector<16x32xf32>
    %78 = arith.addf %75, %77 : vector<16x32xf32>
    %79 = vector.shape_cast %78 : vector<16x32xf32> to vector<2x8x32xf32>
    %c0_34 = arith.constant 0 : index
    %c0_35 = arith.constant 0 : index
    %c0_36 = arith.constant 0 : index
    %80 = vector.load %arg11[%c0_34, %c0_35, %c0_36] : memref<2x8x32xf32, #tpu.memory_space<vmem>>, vector<2x8x32xf32>
    tpu.vector_store %arg11[%c0_34, %c0_35, %c0_36], %79 {strides = array<i32>} : memref<2x8x32xf32, #tpu.memory_space<vmem>>, vector<2x8x32xf32>,
    return
  }
  func.func @transform_0(%arg0: i32) -> (i32, i32, i32) {
    %c0_i32 = arith.constant 0 : i32
    %c0_i32_0 = arith.constant 0 : i32
    %c0_i32_1 = arith.constant 0 : i32
    return %arg0, %c0_i32, %c0_i32_0 : i32, i32, i32
  }
  func.func @transform_1(%arg0: i32) -> (i32, i32, i32) {
    %c0_i32 = arith.constant 0 : i32
    %c0_i32_0 = arith.constant 0 : i32
    %c0_i32_1 = arith.constant 0 : i32
    return %arg0, %c0_i32, %c0_i32_0 : i32, i32, i32
  }
  func.func @transform_2(%arg0: i32) -> (i32, i32, i32) {
    %c0_i32 = arith.constant 0 : i32
    %c0_i32_0 = arith.constant 0 : i32
    %c0_i32_1 = arith.constant 0 : i32
    return %arg0, %c0_i32, %c0_i32_0 : i32, i32, i32
  }
  func.func @transform_3(%arg0: i32) -> (i32, i32, i32) {
    %c0_i32 = arith.constant 0 : i32
    %c0_i32_0 = arith.constant 0 : i32
    %c0_i32_1 = arith.constant 0 : i32
    return %arg0, %c0_i32, %c0_i32_0 : i32, i32, i32
  }
  func.func @transform_4(%arg0: i32) -> (i32, i32) {
    %c0_i32 = arith.constant 0 : i32
    %c0_i32_0 = arith.constant 0 : i32
    %c0_i32_1 = arith.constant 0 : i32
    return %c0_i32, %c0_i32_0 : i32, i32
  }
  func.func @transform_5(%arg0: i32) -> (i32, i32) {
    %c0_i32 = arith.constant 0 : i32
    %c0_i32_0 = arith.constant 0 : i32
    %c0_i32_1 = arith.constant 0 : i32
    return %c0_i32, %c0_i32_0 : i32, i32
  }
  func.func @transform_6(%arg0: i32) -> (i32, i32) {
    %c0_i32 = arith.constant 0 : i32
    %c0_i32_0 = arith.constant 0 : i32
    %c0_i32_1 = arith.constant 0 : i32
    return %c0_i32, %c0_i32_0 : i32, i32
  }
  func.func @transform_7(%arg0: i32) -> (i32, i32) {
    %c0_i32 = arith.constant 0 : i32
    %c0_i32_0 = arith.constant 0 : i32
    %c0_i32_1 = arith.constant 0 : i32
    return %c0_i32, %c0_i32_0 : i32, i32
  }
  func.func @transform_8(%arg0: i32) -> (i32, i32) {
    %c0_i32 = arith.constant 0 : i32
    %c0_i32_0 = arith.constant 0 : i32
    %c0_i32_1 = arith.constant 0 : i32
    return %c0_i32, %c0_i32_0 : i32, i32
  }
  func.func @transform_9(%arg0: i32) -> (i32, i32) {
    %c0_i32 = arith.constant 0 : i32
    %c0_i32_0 = arith.constant 0 : i32
    %c0_i32_1 = arith.constant 0 : i32
    return %c0_i32, %c0_i32_0 : i32, i32
  }
  func.func @transform_10(%arg0: i32) -> (i32, i32, i32) {
    %c0_i32 = arith.constant 0 : i32
    %c0_i32_0 = arith.constant 0 : i32
    %c0_i32_1 = arith.constant 0 : i32
    return %arg0, %c0_i32, %c0_i32_0 : i32, i32, i32
  }
}

</mosaic_0001>

<llo_original>
// kernel: tpu_custom_call.1
$region0: #{tpu_custom_call.1}
  #allocation0 [shape = 'u32[]', space=smem, size = 0x4, offset = 0x4, fixed_abs, tag = 'smem constant byte address 0x4 - core index']
  #allocation1 [shape = 'u32[144,128]{1,0:T(1,128)}', space=vmem, size = 0x12000, scoped, tag = 'internal scratch']
  %s0 = inlined_call_operand.hbm [shape: f32[2,8,32], index: 0, kind: input, shape index: {}]
  %s1 = inlined_call_operand.hbm [shape: f32[2,16,32], index: 1, kind: input, shape index: {}]
  %s2 = inlined_call_operand.hbm [shape: f32[2,8,32], index: 2, kind: input, shape index: {}]
  %s3 = inlined_call_operand.hbm [shape: f32[2,16,32], index: 3, kind: input, shape index: {}]
  %s4 = inlined_call_operand.hbm [shape: f32[32,96], index: 4, kind: input, shape index: {}]
  %s5 = inlined_call_operand.vmem [shape: f32[1,96], index: 5, kind: input, shape index: {}]
  %s6 = inlined_call_operand.hbm [shape: f32[32,32], index: 6, kind: input, shape index: {}]
  %s7 = inlined_call_operand.vmem [shape: f32[1,32], index: 7, kind: input, shape index: {}]
  %s8 = inlined_call_operand.vmem [shape: f32[1,32], index: 8, kind: input, shape index: {}]
  %s9 = inlined_call_operand.vmem [shape: f32[1,32], index: 9, kind: input, shape index: {}]
  %s10 = inlined_call_operand.hbm [shape: f32[2,8,32], index: 10, kind: output, shape index: {}]
  %s11 = sld [smem:[#allocation0]]
  $region74: #{tpu_custom_call.1} parent=0
    _
  %s13 = ssub.s32 1, %s11
  %s14 = scalar_select 0, %s13, %s11
  $region1: #{tpu_custom_call.1} parent=0
    #allocation2 [shape = 'u8[8192]{0}', space=vmem, size = 0x2000, scoped, tag = 'input window, operand 0, single buffered']
    #allocation3 [shape = 's32[1]{0}', space=sflag, size = 0x4, scoped, tag = 'scoped memory for tpu_custom_call.1']
    #allocation4 [shape = 's32[1]{0}', space=sflag, size = 0x4, scoped, tag = 'scoped memory for tpu_custom_call.1']
    #allocation5 [shape = 'u8[16384]{0}', space=vmem, size = 0x4000, scoped, tag = 'input window, operand 1, single buffered']
    #allocation6 [shape = 's32[1]{0}', space=sflag, size = 0x4, scoped, tag = 'scoped memory for tpu_custom_call.1']
    #allocation7 [shape = 'u8[8192]{0}', space=vmem, size = 0x2000, scoped, tag = 'input window, operand 2, single buffered']
    #allocation8 [shape = 'u8[16384]{0}', space=vmem, size = 0x4000, scoped, tag = 'input window, operand 3, single buffered']
    #allocation9 [shape = 's32[1]{0}', space=sflag, size = 0x4, scoped, tag = 'scoped memory for tpu_custom_call.1']
    #allocation10 [shape = 'u8[16384]{0}', space=vmem, size = 0x4000, scoped, tag = 'input window, operand 4, single buffered']
    #allocation11 [shape = 'u8[16384]{0}', space=vmem, size = 0x4000, scoped, tag = 'input window, operand 6, single buffered']
    #allocation12 [shape = 's32[1]{0}', space=sflag, size = 0x4, scoped, tag = 'scoped memory for tpu_custom_call.1']
    #allocation13 [shape = 'u8[8192]{0}', space=vmem, size = 0x2000, scoped, tag = 'output window, operand 0, single buffered']
    %15 = vsyncpa [#allocation3], 0
    %16 = vsyncpa [#allocation6], 0
    %17 = vsyncpa [#allocation9], 0
    %18 = vsyncpa [#allocation12], 0
    %19 = vsyncpa [#allocation4], 0
    // Predicated region
    $region2: #{tpu_custom_call.1} parent=1 // pred_check
      _
    $region3: #{tpu_custom_call.1} parent=1 // pred_check_branch
      %21 = sbr.rel (0) target = $region5
    $region4: #{tpu_custom_call.1} parent=1 // pred_region
      %s23 = ssub.s32 256, 256
      %24 = vsyncadd [#allocation3], %s23
      %s25 = sshll.u32 [#allocation2], 4
      %s26 = int_to_ptr.vmem [resolvable:$true] %s25
      %31 = dma.hbm_to_vmem [thread:$0]  %s0, 256, %s26, [#allocation3], 128, 128, 8
    $region5: #{tpu_custom_call.1} parent=1 // pred_fallthru
      _
    // Predicated region
    $region6: #{tpu_custom_call.1} parent=1 // pred_check
      _
    $region7: #{tpu_custom_call.1} parent=1 // pred_check_branch
      %33 = sbr.rel (0) target = $region9
    $region8: #{tpu_custom_call.1} parent=1 // pred_region
      %s35 = ssub.s32 512, 512
      %36 = vsyncadd [#allocation6], %s35
      %s37 = sshll.u32 [#allocation5], 4
      %s38 = int_to_ptr.vmem [resolvable:$true] %s37
      %43 = dma.hbm_to_vmem [thread:$0]  %s1, 512, %s38, [#allocation6], 128, 128, 8
    $region9: #{tpu_custom_call.1} parent=1 // pred_fallthru
      _
    // Predicated region
    $region10: #{tpu_custom_call.1} parent=1 // pred_check
      _
    $region11: #{tpu_custom_call.1} parent=1 // pred_check_branch
      %45 = sbr.rel (0) target = $region13
    $region12: #{tpu_custom_call.1} parent=1 // pred_region
      %s47 = ssub.s32 256, 256
      %48 = vsyncadd [#allocation6], %s47
      %s49 = sshll.u32 [#allocation7], 4
      %s50 = int_to_ptr.vmem [resolvable:$true] %s49
      %55 = dma.hbm_to_vmem [thread:$0]  %s2, 256, %s50, [#allocation6], 128, 128, 8
    $region13: #{tpu_custom_call.1} parent=1 // pred_fallthru
      _
    // Predicated region
    $region14: #{tpu_custom_call.1} parent=1 // pred_check
      _
    $region15: #{tpu_custom_call.1} parent=1 // pred_check_branch
      %57 = sbr.rel (0) target = $region17
    $region16: #{tpu_custom_call.1} parent=1 // pred_region
      %s59 = ssub.s32 512, 512
      %60 = vsyncadd [#allocation9], %s59
      %s61 = sshll.u32 [#allocation8], 4
      %s62 = int_to_ptr.vmem [resolvable:$true] %s61
      %67 = dma.hbm_to_vmem [thread:$0]  %s3, 512, %s62, [#allocation9], 128, 128, 8
    $region17: #{tpu_custom_call.1} parent=1 // pred_fallthru
      _
    // Predicated region
    $region18: #{tpu_custom_call.1} parent=1 // pred_check
      _
    $region19: #{tpu_custom_call.1} parent=1 // pred_check_branch
      %69 = sbr.rel (0) target = $region21
    $region20: #{tpu_custom_call.1} parent=1 // pred_region
      %s71 = ssub.s32 512, 512
      %72 = vsyncadd [#allocation9], %s71
      %s73 = sshll.u32 [#allocation10], 4
      %s74 = int_to_ptr.vmem [resolvable:$true] %s73
      %79 = dma.hbm_to_vmem [thread:$0]  %s4, 512, %s74, [#allocation9], 128, 128, 8
    $region21: #{tpu_custom_call.1} parent=1 // pred_fallthru
      _
    // Predicated region
    $region22: #{tpu_custom_call.1} parent=1 // pred_check
      _
    $region23: #{tpu_custom_call.1} parent=1 // pred_check_branch
      %81 = sbr.rel (0) target = $region25
    $region24: #{tpu_custom_call.1} parent=1 // pred_region
      _
    $region25: #{tpu_custom_call.1} parent=1 // pred_fallthru
      _
    // Predicated region
    $region26: #{tpu_custom_call.1} parent=1 // pred_check
      _
    $region27: #{tpu_custom_call.1} parent=1 // pred_check_branch
      %83 = sbr.rel (0) target = $region29
    $region28: #{tpu_custom_call.1} parent=1 // pred_region
      %s85 = ssub.s32 512, 512
      %86 = vsyncadd [#allocation12], %s85
      %s87 = sshll.u32 [#allocation11], 4
      %s88 = int_to_ptr.vmem [resolvable:$true] %s87
      %93 = dma.hbm_to_vmem [thread:$0]  %s6, 512, %s88, [#allocation12], 128, 128, 8
    $region29: #{tpu_custom_call.1} parent=1 // pred_fallthru
      _
    // Predicated region
    $region30: #{tpu_custom_call.1} parent=1 // pred_check
      _
    $region31: #{tpu_custom_call.1} parent=1 // pred_check_branch
      %95 = sbr.rel (0) target = $region33
    $region32: #{tpu_custom_call.1} parent=1 // pred_region
      _
    $region33: #{tpu_custom_call.1} parent=1 // pred_fallthru
      _
    // Predicated region
    $region34: #{tpu_custom_call.1} parent=1 // pred_check
      _
    $region35: #{tpu_custom_call.1} parent=1 // pred_check_branch
      %97 = sbr.rel (0) target = $region37
    $region36: #{tpu_custom_call.1} parent=1 // pred_region
      _
    $region37: #{tpu_custom_call.1} parent=1 // pred_fallthru
      _
    // Predicated region
    $region38: #{tpu_custom_call.1} parent=1 // pred_check
      _
    $region39: #{tpu_custom_call.1} parent=1 // pred_check_branch
      %99 = sbr.rel (0) target = $region41
    $region40: #{tpu_custom_call.1} parent=1 // pred_region
      _
    $region41: #{tpu_custom_call.1} parent=1 // pred_fallthru
      _
    // Predicated region
    $region42: #{tpu_custom_call.1} parent=1 // pred_check
      _
    $region43: #{tpu_custom_call.1} parent=1 // pred_check_branch
      %101 = sbr.rel (0) target = $region45
    $region44: #{tpu_custom_call.1} parent=1 // pred_region
      %102 = dma.done [#allocation3], 256
    $region45: #{tpu_custom_call.1} parent=1 // pred_fallthru
      _
    // Predicated region
    $region46: #{tpu_custom_call.1} parent=1 // pred_check
      _
    $region47: #{tpu_custom_call.1} parent=1 // pred_check_branch
      %104 = sbr.rel (0) target = $region49
    $region48: #{tpu_custom_call.1} parent=1 // pred_region
      %105 = dma.done [#allocation6], 512
    $region49: #{tpu_custom_call.1} parent=1 // pred_fallthru
      _
    // Predicated region
    $region50: #{tpu_custom_call.1} parent=1 // pred_check
      _
    $region51: #{tpu_custom_call.1} parent=1 // pred_check_branch
      %107 = sbr.rel (0) target = $region53
    $region52: #{tpu_custom_call.1} parent=1 // pred_region
      %108 = dma.done [#allocation6], 256
    $region53: #{tpu_custom_call.1} parent=1 // pred_fallthru
      _
    // Predicated region
    $region54: #{tpu_custom_call.1} parent=1 // pred_check
      _
    $region55: #{tpu_custom_call.1} parent=1 // pred_check_branch
      %110 = sbr.rel (0) target = $region57
    $region56: #{tpu_custom_call.1} parent=1 // pred_region
      %111 = dma.done [#allocation9], 512
    $region57: #{tpu_custom_call.1} parent=1 // pred_fallthru
      _
    // Predicated region
    $region58: #{tpu_custom_call.1} parent=1 // pred_check
      _
    $region59: #{tpu_custom_call.1} parent=1 // pred_check_branch
      %113 = sbr.rel (0) target = $region61
    $region60: #{tpu_custom_call.1} parent=1 // pred_region
      %114 = dma.done [#allocation9], 512
    $region61: #{tpu_custom_call.1} parent=1 // pred_fallthru
      _
    // Predicated region
    $region62: #{tpu_custom_call.1} parent=1 // pred_check
      _
    $region63: #{tpu_custom_call.1} parent=1 // pred_check_branch
      %116 = sbr.rel (0) target = $region65
    $region64: #{tpu_custom_call.1} parent=1 // pred_region
      %117 = dma.done [#allocation12], 512
    $region65: #{tpu_custom_call.1} parent=1 // pred_fallthru
      _
    %v118 = vld [vmem:[#allocation2] sm:$0xff]
    %v119 = vld [vmem:[#allocation2 + $0x8] sm:$0xff]
    %v120 = vld [vmem:[#allocation5] sm:$0xff]
    %v121 = vld [vmem:[#allocation5 + $0x8] sm:$0xff]
    %v122 = vld [vmem:[#allocation5 + $0x10] sm:$0xff]
    %v123 = vld [vmem:[#allocation5 + $0x18] sm:$0xff]
    %v124 = vld [vmem:[#allocation7] sm:$0xff]
    %v125 = vld [vmem:[#allocation7 + $0x8] sm:$0xff]
    %v126 = vadd.f32 %v118, %v124
    %v127 = vadd.f32 %v119, %v125
    %v128 = vld [vmem:[#allocation8] sm:$0xff]
    %v129 = vld [vmem:[#allocation8 + $0x8] sm:$0xff]
    %v130 = vld [vmem:[#allocation8 + $0x10] sm:$0xff]
    %v131 = vld [vmem:[#allocation8 + $0x18] sm:$0xff]
    %v132 = vadd.f32 %v120, %v128
    %v133 = vadd.f32 %v121, %v129
    %v134 = vadd.f32 %v122, %v130
    %v135 = vadd.f32 %v123, %v131
    %v136 = vld [vmem:[#allocation10] sm:$0xff]
    %v137 = vld [vmem:[#allocation10 + $0x8] sm:$0xff]
    %v138 = vld [vmem:[#allocation10 + $0x10] sm:$0xff]
    %v139 = vld [vmem:[#allocation10 + $0x18] sm:$0xff]
    %v140 = vld [vmem:[%s5] sm:$0x1]
    %v142 = vlaneseq
    %v143 = vshrl.u32 %v142, 7
    %v144 = vsub.s32 0, %v143
    %v145 = vrot.slane %v140, %v144
    %vm147 = vcmask 261120
    %v149 = vsel %vm147, %v126, 0
    %v152 = vsel %vm147, %v127, 0
    %v155 = vsel %vm147, %v132, 0
    %v158 = vsel %vm147, %v133, 0
    %v161 = vsel %vm147, %v134, 0
    %v164 = vsel %vm147, %v135, 0
    %v167 = vsel %vm147, %v120, 0
    %v170 = vsel %vm147, %v121, 0
    %v173 = vsel %vm147, %v122, 0
    %v176 = vsel %vm147, %v123, 0
    %178 = vmatprep.subr.mxu0 0.0
    %179 = vmatpush1.msra.mxu0 0.0
    %180 = vmatprep.subr.mxu0 0.0
    %181 = vmatpush1.msra.mxu0 0.0
    %182 = vmatprep.subr.mxu0 0.0
    %183 = vmatpush1.msra.mxu0 0.0
    %184 = vmatprep.subr.mxu0 0.0
    %185 = vmatpush1.msra.mxu0 0.0
    %186 = vmatprep.subr.mxu0 0.0
    %187 = vmatpush1.msra.mxu0 0.0
    %188 = vmatprep.subr.mxu0 0.0
    %189 = vmatpush1.msra.mxu0 0.0
    %190 = vmatprep.subr.mxu0 0.0
    %191 = vmatpush1.msra.mxu0 0.0
    %192 = vmatprep.subr.mxu0 0.0
    %193 = vmatpush1.msra.mxu0 0.0
    %194 = vmatprep.subr.mxu0 0.0
    %195 = vmatpush1.msra.mxu0 0.0
    %196 = vmatprep.subr.mxu0 0.0
    %197 = vmatpush1.msra.mxu0 0.0
    %198 = vmatprep.subr.mxu0 0.0
    %199 = vmatpush1.msra.mxu0 0.0
    %200 = vmatprep.subr.mxu0 0.0
    %201 = vmatpush1.msra.mxu0 0.0
    %202 = vmatprep.subr.mxu0 0.0
    %203 = vmatpush1.msra.mxu0 %v139
    %204 = vmatprep.subr.mxu0 0.0
    %205 = vmatpush1.msra.mxu0 %v138
    %206 = vmatprep.subr.mxu0 0.0
    %207 = vmatpush1.msra.mxu0 %v137
    %208 = vmatprep.subr.mxu0 0.0
    %209 = vmatpush1.msra.mxu0 %v136
    %210 = vmatprep.subr.mxu0 0.0
    %211 = vmatpush2.msra.mxu0 0.0
    %212 = vmatprep.subr.mxu0 0.0
    %213 = vmatpush2.msra.mxu0 0.0
    %214 = vmatprep.subr.mxu0 0.0
    %215 = vmatpush2.msra.mxu0 0.0
    %216 = vmatprep.subr.mxu0 0.0
    %217 = vmatpush2.msra.mxu0 0.0
    %218 = vmatprep.subr.mxu0 0.0
    %219 = vmatpush2.msra.mxu0 0.0
    %220 = vmatprep.subr.mxu0 0.0
    %221 = vmatpush2.msra.mxu0 0.0
    %222 = vmatprep.subr.mxu0 0.0
    %223 = vmatpush2.msra.mxu0 0.0
    %224 = vmatprep.subr.mxu0 0.0
    %225 = vmatpush2.msra.mxu0 0.0
    %226 = vmatprep.subr.mxu0 0.0
    %227 = vmatpush2.msra.mxu0 0.0
    %228 = vmatprep.subr.mxu0 0.0
    %229 = vmatpush2.msra.mxu0 0.0
    %230 = vmatprep.subr.mxu0 0.0
    %231 = vmatpush2.msra.mxu0 0.0
    %232 = vmatprep.subr.mxu0 0.0
    %233 = vmatpush2.msra.mxu0 0.0
    %234 = vmatprep.subr.mxu0 0.0
    %235 = vmatpush2.msra.mxu0 0.0
    %236 = vmatprep.subr.mxu0 0.0
    %237 = vmatpush2.msra.mxu0 0.0
    %238 = vmatprep.subr.mxu0 0.0
    %239 = vmatpush2.msra.mxu0 0.0
    %240 = vmatprep.subr.mxu0 0.0
    %241 = vmatpush2.msra.mxu0 0.0
    %242 = vmatprep.mubr.f32.mxu0 0.0
    %243 = vmatmul.mubr.f32.gmra.mxu0 %v149
    %v244 = vpop.f32.mrf.mxu0
    %v245 = vadd.f32 %v145, %v244
    %v246 = vpop.f32.mrf.mxu0
    %247 = vmatprep.mubr.f32.mxu0 0.0
    %248 = vmatmul.mubr.f32.gmra.mxu0 %v152
    %v249 = vpop.f32.mrf.mxu0
    %v250 = vadd.f32 %v145, %v249
    %v251 = vpop.f32.mrf.mxu0
    %252 = vmatprep.mubr.f32.mxu0 0.0
    %253 = vmatmul.mubr.f32.gmra.mxu0 %v155
    %v254 = vpop.f32.mrf.mxu0
    %v255 = vadd.f32 %v145, %v254
    %v256 = vpop.f32.mrf.mxu0
    %257 = vmatprep.mubr.f32.mxu0 0.0
    %258 = vmatmul.mubr.f32.gmra.mxu0 %v158
    %v259 = vpop.f32.mrf.mxu0
    %v260 = vadd.f32 %v145, %v259
    %v261 = vpop.f32.mrf.mxu0
    %262 = vmatprep.mubr.f32.mxu0 0.0
    %263 = vmatmul.mubr.f32.gmra.mxu0 %v161
    %v264 = vpop.f32.mrf.mxu0
    %v265 = vadd.f32 %v145, %v264
    %v266 = vpop.f32.mrf.mxu0
    %267 = vmatprep.mubr.f32.mxu0 0.0
    %268 = vmatmul.mubr.f32.gmra.mxu0 %v164
    %v269 = vpop.f32.mrf.mxu0
    %v270 = vadd.f32 %v145, %v269
    %v271 = vpop.f32.mrf.mxu0
    %272 = vmatprep.mubr.f32.mxu0 0.0
    %273 = vmatmul.mubr.f32.gmra.mxu0 %v167
    %v274 = vpop.f32.mrf.mxu0
    %v275 = vadd.f32 %v145, %v274
    %v276 = vpop.f32.mrf.mxu0
    %277 = vmatprep.mubr.f32.mxu0 0.0
    %278 = vmatmul.mubr.f32.gmra.mxu0 %v170
    %v279 = vpop.f32.mrf.mxu0
    %v280 = vadd.f32 %v145, %v279
    %v281 = vpop.f32.mrf.mxu0
    %282 = vmatprep.mubr.f32.mxu0 0.0
    %283 = vmatmul.mubr.f32.gmra.mxu0 %v173
    %v284 = vpop.f32.mrf.mxu0
    %v285 = vadd.f32 %v145, %v284
    %v286 = vpop.f32.mrf.mxu0
    %287 = vmatprep.mubr.f32.mxu0 0.0
    %288 = vmatmul.mubr.f32.gmra.mxu0 %v176
    %v289 = vpop.f32.mrf.mxu0
    %v290 = vadd.f32 %v145, %v289
    %v291 = vpop.f32.mrf.mxu0
    %292 = vdwg.mxu0
    %v293 = vmul.f32 %v245, 0.35355338
    %v294 = vmul.f32 %v250, 0.35355338
    %295 = vxpose.xlu0.b32.start [1/16] %v293, 128
    %296 = vxpose.xlu0.b32.cont [2/16] 0.0, 128
    %297 = vxpose.xlu0.b32.cont [3/16] 0.0, 128
    %298 = vxpose.xlu0.b32.cont [4/16] 0.0, 128
    %299 = vxpose.xlu0.b32.cont [5/16] 0.0, 128
    %300 = vxpose.xlu0.b32.cont [6/16] 0.0, 128
    %301 = vxpose.xlu0.b32.cont [7/16] 0.0, 128
    %302 = vxpose.xlu0.b32.cont [8/16] 0.0, 128
    %303 = vxpose.xlu0.b32.cont [9/16] 0.0, 128
    %304 = vxpose.xlu0.b32.cont [10/16] 0.0, 128
    %305 = vxpose.xlu0.b32.cont [11/16] 0.0, 128
    %306 = vxpose.xlu0.b32.cont [12/16] 0.0, 128
    %307 = vxpose.xlu0.b32.cont [13/16] 0.0, 128
    %308 = vxpose.xlu0.b32.cont [14/16] 0.0, 128
    %309 = vxpose.xlu0.b32.cont [15/16] 0.0, 128
    %310 = vxpose.xlu0.b32.end [16/16] 0.0, 128
    %v311 = vpop.trf.xlu0
    %v312 = vpop.trf.xlu0
    %v313 = vpop.trf.xlu0
    %v314 = vpop.trf.xlu0
    %v315 = vpop.trf.xlu0
    %v316 = vpop.trf.xlu0
    %v317 = vpop.trf.xlu0
    %v318 = vpop.trf.xlu0
    %v319 = vpop.trf.xlu0
    %v320 = vpop.trf.xlu0
    %v321 = vpop.trf.xlu0
    %v322 = vpop.trf.xlu0
    %v323 = vpop.trf.xlu0
    %v324 = vpop.trf.xlu0
    %v325 = vpop.trf.xlu0
    %v326 = vpop.trf.xlu0
    %327 = vxpose.xlu0.b32.start [1/16] %v294, 128
    %328 = vxpose.xlu0.b32.cont [2/16] 0.0, 128
    %329 = vxpose.xlu0.b32.cont [3/16] 0.0, 128
    %330 = vxpose.xlu0.b32.cont [4/16] 0.0, 128
    %331 = vxpose.xlu0.b32.cont [5/16] 0.0, 128
    %332 = vxpose.xlu0.b32.cont [6/16] 0.0, 128
    %333 = vxpose.xlu0.b32.cont [7/16] 0.0, 128
    %334 = vxpose.xlu0.b32.cont [8/16] 0.0, 128
    %335 = vxpose.xlu0.b32.cont [9/16] 0.0, 128
    %336 = vxpose.xlu0.b32.cont [10/16] 0.0, 128
    %337 = vxpose.xlu0.b32.cont [11/16] 0.0, 128
    %338 = vxpose.xlu0.b32.cont [12/16] 0.0, 128
    %339 = vxpose.xlu0.b32.cont [13/16] 0.0, 128
    %340 = vxpose.xlu0.b32.cont [14/16] 0.0, 128
    %341 = vxpose.xlu0.b32.cont [15/16] 0.0, 128
    %342 = vxpose.xlu0.b32.end [16/16] 0.0, 128
    %v343 = vpop.trf.xlu0
    %v344 = vpop.trf.xlu0
    %v345 = vpop.trf.xlu0
    %v346 = vpop.trf.xlu0
    %v347 = vpop.trf.xlu0
    %v348 = vpop.trf.xlu0
    %v349 = vpop.trf.xlu0
    %v350 = vpop.trf.xlu0
    %v351 = vpop.trf.xlu0
    %v352 = vpop.trf.xlu0
    %v353 = vpop.trf.xlu0
    %v354 = vpop.trf.xlu0
    %v355 = vpop.trf.xlu0
    %v356 = vpop.trf.xlu0
    %v357 = vpop.trf.xlu0
    %v358 = vpop.trf.xlu0
    %359 = vxpose.xlu0.b32.start [1/16] %v311, 128
    %360 = vxpose.xlu0.b32.cont [2/16] 0.0, 128
    %361 = vxpose.xlu0.b32.cont [3/16] 0.0, 128
    %362 = vxpose.xlu0.b32.cont [4/16] 0.0, 128
    %363 = vxpose.xlu0.b32.cont [5/16] 0.0, 128
    %364 = vxpose.xlu0.b32.cont [6/16] 0.0, 128
    %365 = vxpose.xlu0.b32.cont [7/16] 0.0, 128
    %366 = vxpose.xlu0.b32.cont [8/16] 0.0, 128
    %367 = vxpose.xlu0.b32.cont [9/16] 0.0, 128
    %368 = vxpose.xlu0.b32.cont [10/16] 0.0, 128
    %369 = vxpose.xlu0.b32.cont [11/16] 0.0, 128
    %370 = vxpose.xlu0.b32.cont [12/16] 0.0, 128
    %371 = vxpose.xlu0.b32.cont [13/16] 0.0, 128
    %372 = vxpose.xlu0.b32.cont [14/16] 0.0, 128
    %373 = vxpose.xlu0.b32.cont [15/16] 0.0, 128
    %374 = vxpose.xlu0.b32.end [16/16] 0.0, 128
    %v375 = vpop.trf.xlu0
    %v376 = vpop.trf.xlu0
    %v377 = vpop.trf.xlu0
    %v378 = vpop.trf.xlu0
    %v379 = vpop.trf.xlu0
    %v380 = vpop.trf.xlu0
    %v381 = vpop.trf.xlu0
    %v382 = vpop.trf.xlu0
    %v383 = vpop.trf.xlu0
    %v384 = vpop.trf.xlu0
    %v385 = vpop.trf.xlu0
    %v386 = vpop.trf.xlu0
    %v387 = vpop.trf.xlu0
    %v388 = vpop.trf.xlu0
    %v389 = vpop.trf.xlu0
    %v390 = vpop.trf.xlu0
    %391 = vxpose.xlu0.b32.start [1/16] %v312, 128
    %392 = vxpose.xlu0.b32.cont [2/16] 0.0, 128
    %393 = vxpose.xlu0.b32.cont [3/16] 0.0, 128
    %394 = vxpose.xlu0.b32.cont [4/16] 0.0, 128
    %395 = vxpose.xlu0.b32.cont [5/16] 0.0, 128
    %396 = vxpose.xlu0.b32.cont [6/16] 0.0, 128
    %397 = vxpose.xlu0.b32.cont [7/16] 0.0, 128
    %398 = vxpose.xlu0.b32.cont [8/16] 0.0, 128
    %399 = vxpose.xlu0.b32.cont [9/16] 0.0, 128
    %400 = vxpose.xlu0.b32.cont [10/16] 0.0, 128
    %401 = vxpose.xlu0.b32.cont [11/16] 0.0, 128
    %402 = vxpose.xlu0.b32.cont [12/16] 0.0, 128
    %403 = vxpose.xlu0.b32.cont [13/16] 0.0, 128
    %404 = vxpose.xlu0.b32.cont [14/16] 0.0, 128
    %405 = vxpose.xlu0.b32.cont [15/16] 0.0, 128
    %406 = vxpose.xlu0.b32.end [16/16] 0.0, 128
    %v407 = vpop.trf.xlu0
    %v408 = vpop.trf.xlu0
    %v409 = vpop.trf.xlu0
    %v410 = vpop.trf.xlu0
    %v411 = vpop.trf.xlu0
    %v412 = vpop.trf.xlu0
    %v413 = vpop.trf.xlu0
    %v414 = vpop.trf.xlu0
    %v415 = vpop.trf.xlu0
    %v416 = vpop.trf.xlu0
    %v417 = vpop.trf.xlu0
    %v418 = vpop.trf.xlu0
    %v419 = vpop.trf.xlu0
    %v420 = vpop.trf.xlu0
    %v421 = vpop.trf.xlu0
    %v422 = vpop.trf.xlu0
    %423 = vxpose.xlu0.b32.start [1/16] %v313, 128
    %424 = vxpose.xlu0.b32.cont [2/16] 0.0, 128
    %425 = vxpose.xlu0.b32.cont [3/16] 0.0, 128
    %426 = vxpose.xlu0.b32.cont [4/16] 0.0, 128
    %427 = vxpose.xlu0.b32.cont [5/16] 0.0, 128
    %428 = vxpose.xlu0.b32.cont [6/16] 0.0, 128
    %429 = vxpose.xlu0.b32.cont [7/16] 0.0, 128
    %430 = vxpose.xlu0.b32.cont [8/16] 0.0, 128
    %431 = vxpose.xlu0.b32.cont [9/16] 0.0, 128
    %432 = vxpose.xlu0.b32.cont [10/16] 0.0, 128
    %433 = vxpose.xlu0.b32.cont [11/16] 0.0, 128
    %434 = vxpose.xlu0.b32.cont [12/16] 0.0, 128
    %435 = vxpose.xlu0.b32.cont [13/16] 0.0, 128
    %436 = vxpose.xlu0.b32.cont [14/16] 0.0, 128
    %437 = vxpose.xlu0.b32.cont [15/16] 0.0, 128
    %438 = vxpose.xlu0.b32.end [16/16] 0.0, 128
    %v439 = vpop.trf.xlu0
    %v440 = vpop.trf.xlu0
    %v441 = vpop.trf.xlu0
    %v442 = vpop.trf.xlu0
    %v443 = vpop.trf.xlu0
    %v444 = vpop.trf.xlu0
    %v445 = vpop.trf.xlu0
    %v446 = vpop.trf.xlu0
    %v447 = vpop.trf.xlu0
    %v448 = vpop.trf.xlu0
    %v449 = vpop.trf.xlu0
    %v450 = vpop.trf.xlu0
    %v451 = vpop.trf.xlu0
    %v452 = vpop.trf.xlu0
    %v453 = vpop.trf.xlu0
    %v454 = vpop.trf.xlu0
    %455 = vxpose.xlu0.b32.start [1/16] %v314, 128
    %456 = vxpose.xlu0.b32.cont [2/16] 0.0, 128
    %457 = vxpose.xlu0.b32.cont [3/16] 0.0, 128
    %458 = vxpose.xlu0.b32.cont [4/16] 0.0, 128
    %459 = vxpose.xlu0.b32.cont [5/16] 0.0, 128
    %460 = vxpose.xlu0.b32.cont [6/16] 0.0, 128
    %461 = vxpose.xlu0.b32.cont [7/16] 0.0, 128
    %462 = vxpose.xlu0.b32.cont [8/16] 0.0, 128
    %463 = vxpose.xlu0.b32.cont [9/16] 0.0, 128
    %464 = vxpose.xlu0.b32.cont [10/16] 0.0, 128
    %465 = vxpose.xlu0.b32.cont [11/16] 0.0, 128
    %466 = vxpose.xlu0.b32.cont [12/16] 0.0, 128
    %467 = vxpose.xlu0.b32.cont [13/16] 0.0, 128
    %468 = vxpose.xlu0.b32.cont [14/16] 0.0, 128
    %469 = vxpose.xlu0.b32.cont [15/16] 0.0, 128
    %470 = vxpose.xlu0.b32.end [16/16] 0.0, 128
    %v471 = vpop.trf.xlu0
    %v472 = vpop.trf.xlu0
    %v473 = vpop.trf.xlu0
    %v474 = vpop.trf.xlu0
    %v475 = vpop.trf.xlu0
    %v476 = vpop.trf.xlu0
    %v477 = vpop.trf.xlu0
    %v478 = vpop.trf.xlu0
    %v479 = vpop.trf.xlu0
    %v480 = vpop.trf.xlu0
    %v481 = vpop.trf.xlu0
    %v482 = vpop.trf.xlu0
    %v483 = vpop.trf.xlu0
    %v484 = vpop.trf.xlu0
    %v485 = vpop.trf.xlu0
    %v486 = vpop.trf.xlu0
    %487 = vxpose.xlu0.b32.start [1/16] %v343, 128
    %488 = vxpose.xlu0.b32.cont [2/16] 0.0, 128
    %489 = vxpose.xlu0.b32.cont [3/16] 0.0, 128
    %490 = vxpose.xlu0.b32.cont [4/16] 0.0, 128
    %491 = vxpose.xlu0.b32.cont [5/16] 0.0, 128
    %492 = vxpose.xlu0.b32.cont [6/16] 0.0, 128
    %493 = vxpose.xlu0.b32.cont [7/16] 0.0, 128
    %494 = vxpose.xlu0.b32.cont [8/16] 0.0, 128
    %495 = vxpose.xlu0.b32.cont [9/16] 0.0, 128
    %496 = vxpose.xlu0.b32.cont [10/16] 0.0, 128
    %497 = vxpose.xlu0.b32.cont [11/16] 0.0, 128
    %498 = vxpose.xlu0.b32.cont [12/16] 0.0, 128
    %499 = vxpose.xlu0.b32.cont [13/16] 0.0, 128
    %500 = vxpose.xlu0.b32.cont [14/16] 0.0, 128
    %501 = vxpose.xlu0.b32.cont [15/16] 0.0, 128
    %502 = vxpose.xlu0.b32.end [16/16] 0.0, 128
    %v503 = vpop.trf.xlu0
    %v504 = vpop.trf.xlu0
    %v505 = vpop.trf.xlu0
    %v506 = vpop.trf.xlu0
    %v507 = vpop.trf.xlu0
    %v508 = vpop.trf.xlu0
    %v509 = vpop.trf.xlu0
    %v510 = vpop.trf.xlu0
    %v511 = vpop.trf.xlu0
    %v512 = vpop.trf.xlu0
    %v513 = vpop.trf.xlu0
    %v514 = vpop.trf.xlu0
    %v515 = vpop.trf.xlu0
    %v516 = vpop.trf.xlu0
    %v517 = vpop.trf.xlu0
    %v518 = vpop.trf.xlu0
    %519 = vxpose.xlu0.b32.start [1/16] %v344, 128
    %520 = vxpose.xlu0.b32.cont [2/16] 0.0, 128
    %521 = vxpose.xlu0.b32.cont [3/16] 0.0, 128
    %522 = vxpose.xlu0.b32.cont [4/16] 0.0, 128
    %523 = vxpose.xlu0.b32.cont [5/16] 0.0, 128
    %524 = vxpose.xlu0.b32.cont [6/16] 0.0, 128
    %525 = vxpose.xlu0.b32.cont [7/16] 0.0, 128
    %526 = vxpose.xlu0.b32.cont [8/16] 0.0, 128
    %527 = vxpose.xlu0.b32.cont [9/16] 0.0, 128
    %528 = vxpose.xlu0.b32.cont [10/16] 0.0, 128
    %529 = vxpose.xlu0.b32.cont [11/16] 0.0, 128
    %530 = vxpose.xlu0.b32.cont [12/16] 0.0, 128
    %531 = vxpose.xlu0.b32.cont [13/16] 0.0, 128
    %532 = vxpose.xlu0.b32.cont [14/16] 0.0, 128
    %533 = vxpose.xlu0.b32.cont [15/16] 0.0, 128
    %534 = vxpose.xlu0.b32.end [16/16] 0.0, 128
    %v535 = vpop.trf.xlu0
    %v536 = vpop.trf.xlu0
    %v537 = vpop.trf.xlu0
    %v538 = vpop.trf.xlu0
    %v539 = vpop.trf.xlu0
    %v540 = vpop.trf.xlu0
    %v541 = vpop.trf.xlu0
    %v542 = vpop.trf.xlu0
    %v543 = vpop.trf.xlu0
    %v544 = vpop.trf.xlu0
    %v545 = vpop.trf.xlu0
    %v546 = vpop.trf.xlu0
    %v547 = vpop.trf.xlu0
    %v548 = vpop.trf.xlu0
    %v549 = vpop.trf.xlu0
    %v550 = vpop.trf.xlu0
    %551 = vxpose.xlu0.b32.start [1/16] %v345, 128
    %552 = vxpose.xlu0.b32.cont [2/16] 0.0, 128
    %553 = vxpose.xlu0.b32.cont [3/16] 0.0, 128
    %554 = vxpose.xlu0.b32.cont [4/16] 0.0, 128
    %555 = vxpose.xlu0.b32.cont [5/16] 0.0, 128
    %556 = vxpose.xlu0.b32.cont [6/16] 0.0, 128
    %557 = vxpose.xlu0.b32.cont [7/16] 0.0, 128
    %558 = vxpose.xlu0.b32.cont [8/16] 0.0, 128
    %559 = vxpose.xlu0.b32.cont [9/16] 0.0, 128
    %560 = vxpose.xlu0.b32.cont [10/16] 0.0, 128
    %561 = vxpose.xlu0.b32.cont [11/16] 0.0, 128
    %562 = vxpose.xlu0.b32.cont [12/16] 0.0, 128
    %563 = vxpose.xlu0.b32.cont [13/16] 0.0, 128
    %564 = vxpose.xlu0.b32.cont [14/16] 0.0, 128
    %565 = vxpose.xlu0.b32.cont [15/16] 0.0, 128
    %566 = vxpose.xlu0.b32.end [16/16] 0.0, 128
    %v567 = vpop.trf.xlu0
    %v568 = vpop.trf.xlu0
    %v569 = vpop.trf.xlu0
    %v570 = vpop.trf.xlu0
    %v571 = vpop.trf.xlu0
    %v572 = vpop.trf.xlu0
    %v573 = vpop.trf.xlu0
    %v574 = vpop.trf.xlu0
    %v575 = vpop.trf.xlu0
    %v576 = vpop.trf.xlu0
    %v577 = vpop.trf.xlu0
    %v578 = vpop.trf.xlu0
    %v579 = vpop.trf.xlu0
    %v580 = vpop.trf.xlu0
    %v581 = vpop.trf.xlu0
    %v582 = vpop.trf.xlu0
    %583 = vxpose.xlu0.b32.start [1/16] %v346, 128
    %584 = vxpose.xlu0.b32.cont [2/16] 0.0, 128
    %585 = vxpose.xlu0.b32.cont [3/16] 0.0, 128
    %586 = vxpose.xlu0.b32.cont [4/16] 0.0, 128
    %587 = vxpose.xlu0.b32.cont [5/16] 0.0, 128
    %588 = vxpose.xlu0.b32.cont [6/16] 0.0, 128
    %589 = vxpose.xlu0.b32.cont [7/16] 0.0, 128
    %590 = vxpose.xlu0.b32.cont [8/16] 0.0, 128
    %591 = vxpose.xlu0.b32.cont [9/16] 0.0, 128
    %592 = vxpose.xlu0.b32.cont [10/16] 0.0, 128
    %593 = vxpose.xlu0.b32.cont [11/16] 0.0, 128
    %594 = vxpose.xlu0.b32.cont [12/16] 0.0, 128
    %595 = vxpose.xlu0.b32.cont [13/16] 0.0, 128
    %596 = vxpose.xlu0.b32.cont [14/16] 0.0, 128
    %597 = vxpose.xlu0.b32.cont [15/16] 0.0, 128
    %598 = vxpose.xlu0.b32.end [16/16] 0.0, 128
    %v599 = vpop.trf.xlu0
    %v600 = vpop.trf.xlu0
    %v601 = vpop.trf.xlu0
    %v602 = vpop.trf.xlu0
    %v603 = vpop.trf.xlu0
    %v604 = vpop.trf.xlu0
    %v605 = vpop.trf.xlu0
    %v606 = vpop.trf.xlu0
    %v607 = vpop.trf.xlu0
    %v608 = vpop.trf.xlu0
    %v609 = vpop.trf.xlu0
    %v610 = vpop.trf.xlu0
    %v611 = vpop.trf.xlu0
    %v612 = vpop.trf.xlu0
    %v613 = vpop.trf.xlu0
    %v614 = vpop.trf.xlu0
    %619 = vrot.lane.b32.xlu0 %v255, 96
    %v620 = vpop.permute.xlu0 %619
    %621 = vrot.lane.b32.xlu0 %v260, 96
    %v622 = vpop.permute.xlu0 %621
    %623 = vrot.lane.b32.xlu0 %v265, 96
    %v624 = vpop.permute.xlu0 %623
    %625 = vrot.lane.b32.xlu0 %v270, 96
    %v626 = vpop.permute.xlu0 %625
    %631 = vxpose.xlu0.b32.start [1/16] %v620, 128
    %632 = vxpose.xlu0.b32.cont [2/16] %v622, 128
    %633 = vxpose.xlu0.b32.cont [3/16] 0.0, 128
    %634 = vxpose.xlu0.b32.cont [4/16] 0.0, 128
    %635 = vxpose.xlu0.b32.cont [5/16] 0.0, 128
    %636 = vxpose.xlu0.b32.cont [6/16] 0.0, 128
    %637 = vxpose.xlu0.b32.cont [7/16] 0.0, 128
    %638 = vxpose.xlu0.b32.cont [8/16] 0.0, 128
    %639 = vxpose.xlu0.b32.cont [9/16] 0.0, 128
    %640 = vxpose.xlu0.b32.cont [10/16] 0.0, 128
    %641 = vxpose.xlu0.b32.cont [11/16] 0.0, 128
    %642 = vxpose.xlu0.b32.cont [12/16] 0.0, 128
    %643 = vxpose.xlu0.b32.cont [13/16] 0.0, 128
    %644 = vxpose.xlu0.b32.cont [14/16] 0.0, 128
    %645 = vxpose.xlu0.b32.cont [15/16] 0.0, 128
    %646 = vxpose.xlu0.b32.end [16/16] 0.0, 128
    %v647 = vpop.trf.xlu0
    %v648 = vpop.trf.xlu0
    %v649 = vpop.trf.xlu0
    %v650 = vpop.trf.xlu0
    %v651 = vpop.trf.xlu0
    %v652 = vpop.trf.xlu0
    %v653 = vpop.trf.xlu0
    %v654 = vpop.trf.xlu0
    %v655 = vpop.trf.xlu0
    %v656 = vpop.trf.xlu0
    %v657 = vpop.trf.xlu0
    %v658 = vpop.trf.xlu0
    %v659 = vpop.trf.xlu0
    %v660 = vpop.trf.xlu0
    %v661 = vpop.trf.xlu0
    %v662 = vpop.trf.xlu0
    %663 = vxpose.xlu0.b32.start [1/16] %v624, 128
    %664 = vxpose.xlu0.b32.cont [2/16] %v626, 128
    %665 = vxpose.xlu0.b32.cont [3/16] 0.0, 128
    %666 = vxpose.xlu0.b32.cont [4/16] 0.0, 128
    %667 = vxpose.xlu0.b32.cont [5/16] 0.0, 128
    %668 = vxpose.xlu0.b32.cont [6/16] 0.0, 128
    %669 = vxpose.xlu0.b32.cont [7/16] 0.0, 128
    %670 = vxpose.xlu0.b32.cont [8/16] 0.0, 128
    %671 = vxpose.xlu0.b32.cont [9/16] 0.0, 128
    %672 = vxpose.xlu0.b32.cont [10/16] 0.0, 128
    %673 = vxpose.xlu0.b32.cont [11/16] 0.0, 128
    %674 = vxpose.xlu0.b32.cont [12/16] 0.0, 128
    %675 = vxpose.xlu0.b32.cont [13/16] 0.0, 128
    %676 = vxpose.xlu0.b32.cont [14/16] 0.0, 128
    %677 = vxpose.xlu0.b32.cont [15/16] 0.0, 128
    %678 = vxpose.xlu0.b32.end [16/16] 0.0, 128
    %v679 = vpop.trf.xlu0
    %v680 = vpop.trf.xlu0
    %v681 = vpop.trf.xlu0
    %v682 = vpop.trf.xlu0
    %v683 = vpop.trf.xlu0
    %v684 = vpop.trf.xlu0
    %v685 = vpop.trf.xlu0
    %v686 = vpop.trf.xlu0
    %v687 = vpop.trf.xlu0
    %v688 = vpop.trf.xlu0
    %v689 = vpop.trf.xlu0
    %v690 = vpop.trf.xlu0
    %v691 = vpop.trf.xlu0
    %v692 = vpop.trf.xlu0
    %v693 = vpop.trf.xlu0
    %v694 = vpop.trf.xlu0
    %699 = vrot.lane.b32.xlu0 %v275, 64
    %v700 = vpop.permute.xlu0 %699
    %701 = vrot.lane.b32.xlu0 %v280, 64
    %v702 = vpop.permute.xlu0 %701
    %703 = vrot.lane.b32.xlu0 %v285, 64
    %v704 = vpop.permute.xlu0 %703
    %705 = vrot.lane.b32.xlu0 %v290, 64
    %v706 = vpop.permute.xlu0 %705
    %711 = vxpose.xlu0.b32.start [1/16] %v700, 128
    %712 = vxpose.xlu0.b32.cont [2/16] %v702, 128
    %713 = vxpose.xlu0.b32.cont [3/16] 0.0, 128
    %714 = vxpose.xlu0.b32.cont [4/16] 0.0, 128
    %715 = vxpose.xlu0.b32.cont [5/16] 0.0, 128
    %716 = vxpose.xlu0.b32.cont [6/16] 0.0, 128
    %717 = vxpose.xlu0.b32.cont [7/16] 0.0, 128
    %718 = vxpose.xlu0.b32.cont [8/16] 0.0, 128
    %719 = vxpose.xlu0.b32.cont [9/16] 0.0, 128
    %720 = vxpose.xlu0.b32.cont [10/16] 0.0, 128
    %721 = vxpose.xlu0.b32.cont [11/16] 0.0, 128
    %722 = vxpose.xlu0.b32.cont [12/16] 0.0, 128
    %723 = vxpose.xlu0.b32.cont [13/16] 0.0, 128
    %724 = vxpose.xlu0.b32.cont [14/16] 0.0, 128
    %725 = vxpose.xlu0.b32.cont [15/16] 0.0, 128
    %726 = vxpose.xlu0.b32.end [16/16] 0.0, 128
    %v727 = vpop.trf.xlu0
    %v728 = vpop.trf.xlu0
    %v729 = vpop.trf.xlu0
    %v730 = vpop.trf.xlu0
    %v731 = vpop.trf.xlu0
    %v732 = vpop.trf.xlu0
    %v733 = vpop.trf.xlu0
    %v734 = vpop.trf.xlu0
    %v735 = vpop.trf.xlu0
    %v736 = vpop.trf.xlu0
    %v737 = vpop.trf.xlu0
    %v738 = vpop.trf.xlu0
    %v739 = vpop.trf.xlu0
    %v740 = vpop.trf.xlu0
    %v741 = vpop.trf.xlu0
    %v742 = vpop.trf.xlu0
    %743 = vxpose.xlu0.b32.start [1/16] %v704, 128
    %744 = vxpose.xlu0.b32.cont [2/16] %v706, 128
    %745 = vxpose.xlu0.b32.cont [3/16] 0.0, 128
    %746 = vxpose.xlu0.b32.cont [4/16] 0.0, 128
    %747 = vxpose.xlu0.b32.cont [5/16] 0.0, 128
    %748 = vxpose.xlu0.b32.cont [6/16] 0.0, 128
    %749 = vxpose.xlu0.b32.cont [7/16] 0.0, 128
    %750 = vxpose.xlu0.b32.cont [8/16] 0.0, 128
    %751 = vxpose.xlu0.b32.cont [9/16] 0.0, 128
    %752 = vxpose.xlu0.b32.cont [10/16] 0.0, 128
    %753 = vxpose.xlu0.b32.cont [11/16] 0.0, 128
    %754 = vxpose.xlu0.b32.cont [12/16] 0.0, 128
    %755 = vxpose.xlu0.b32.cont [13/16] 0.0, 128
    %756 = vxpose.xlu0.b32.cont [14/16] 0.0, 128
    %757 = vxpose.xlu0.b32.cont [15/16] 0.0, 128
    %758 = vxpose.xlu0.b32.end [16/16] 0.0, 128
    %v759 = vpop.trf.xlu0
    %v760 = vpop.trf.xlu0
    %v761 = vpop.trf.xlu0
    %v762 = vpop.trf.xlu0
    %v763 = vpop.trf.xlu0
    %v764 = vpop.trf.xlu0
    %v765 = vpop.trf.xlu0
    %v766 = vpop.trf.xlu0
    %v767 = vpop.trf.xlu0
    %v768 = vpop.trf.xlu0
    %v769 = vpop.trf.xlu0
    %v770 = vpop.trf.xlu0
    %v771 = vpop.trf.xlu0
    %v772 = vpop.trf.xlu0
    %v773 = vpop.trf.xlu0
    %v774 = vpop.trf.xlu0
    %vm775 = vcmask 64512
    %v777 = vsel %vm775, %v375, 0
    %779 = vmatprep.subr.mxu0 0.0
    %780 = vmatpush1.msra.mxu0 0.0
    %781 = vmatprep.subr.mxu0 0.0
    %782 = vmatpush1.msra.mxu0 0.0
    %783 = vmatprep.subr.mxu0 0.0
    %784 = vmatpush1.msra.mxu0 0.0
    %785 = vmatprep.subr.mxu0 0.0
    %786 = vmatpush1.msra.mxu0 0.0
    %787 = vmatprep.subr.mxu0 0.0
    %788 = vmatpush1.msra.mxu0 0.0
    %789 = vmatprep.subr.mxu0 0.0
    %790 = vmatpush1.msra.mxu0 0.0
    %791 = vmatprep.subr.mxu0 0.0
    %792 = vmatpush1.msra.mxu0 0.0
    %793 = vmatprep.subr.mxu0 0.0
    %794 = vmatpush1.msra.mxu0 0.0
    %795 = vmatprep.subr.mxu0 0.0
    %796 = vmatpush1.msra.mxu0 0.0
    %797 = vmatprep.subr.mxu0 0.0
    %798 = vmatpush1.msra.mxu0 0.0
    %799 = vmatprep.subr.mxu0 0.0
    %800 = vmatpush1.msra.mxu0 0.0
    %801 = vmatprep.subr.mxu0 0.0
    %802 = vmatpush1.msra.mxu0 0.0
    %803 = vmatprep.subr.mxu0 0.0
    %804 = vmatpush1.msra.mxu0 0.0
    %805 = vmatprep.subr.mxu0 0.0
    %806 = vmatpush1.msra.mxu0 0.0
    %807 = vmatprep.subr.mxu0 0.0
    %808 = vmatpush1.msra.mxu0 0.0
    %809 = vmatprep.subr.mxu0 0.0
    %810 = vmatpush1.msra.mxu0 %v647
    %811 = vmatprep.subr.mxu0 0.0
    %812 = vmatpush2.msra.mxu0 0.0
    %813 = vmatprep.subr.mxu0 0.0
    %814 = vmatpush2.msra.mxu0 0.0
    %815 = vmatprep.subr.mxu0 0.0
    %816 = vmatpush2.msra.mxu0 0.0
    %817 = vmatprep.subr.mxu0 0.0
    %818 = vmatpush2.msra.mxu0 0.0
    %819 = vmatprep.subr.mxu0 0.0
    %820 = vmatpush2.msra.mxu0 0.0
    %821 = vmatprep.subr.mxu0 0.0
    %822 = vmatpush2.msra.mxu0 0.0
    %823 = vmatprep.subr.mxu0 0.0
    %824 = vmatpush2.msra.mxu0 0.0
    %825 = vmatprep.subr.mxu0 0.0
    %826 = vmatpush2.msra.mxu0 0.0
    %827 = vmatprep.subr.mxu0 0.0
    %828 = vmatpush2.msra.mxu0 0.0
    %829 = vmatprep.subr.mxu0 0.0
    %830 = vmatpush2.msra.mxu0 0.0
    %831 = vmatprep.subr.mxu0 0.0
    %832 = vmatpush2.msra.mxu0 0.0
    %833 = vmatprep.subr.mxu0 0.0
    %834 = vmatpush2.msra.mxu0 0.0
    %835 = vmatprep.subr.mxu0 0.0
    %836 = vmatpush2.msra.mxu0 0.0
    %837 = vmatprep.subr.mxu0 0.0
    %838 = vmatpush2.msra.mxu0 0.0
    %839 = vmatprep.subr.mxu0 0.0
    %840 = vmatpush2.msra.mxu0 0.0
    %841 = vmatprep.subr.mxu0 0.0
    %842 = vmatpush2.msra.mxu0 0.0
    %843 = vmatprep.mubr.f32.mxu0 0.0
    %844 = vmatmul.mubr.f32.gmra.mxu0 %v777
    %v845 = vpop.f32.mrf.mxu0
    %v846 = vadd.f32 0.0, %v845
    %v847 = vpop.f32.mrf.mxu0
    %848 = vdwg.mxu0
    %v850 = vsel %vm775, %v407, 0
    %852 = vmatprep.subr.mxu0 0.0
    %853 = vmatpush1.msra.mxu0 0.0
    %854 = vmatprep.subr.mxu0 0.0
    %855 = vmatpush1.msra.mxu0 0.0
    %856 = vmatprep.subr.mxu0 0.0
    %857 = vmatpush1.msra.mxu0 0.0
    %858 = vmatprep.subr.mxu0 0.0
    %859 = vmatpush1.msra.mxu0 0.0
    %860 = vmatprep.subr.mxu0 0.0
    %861 = vmatpush1.msra.mxu0 0.0
    %862 = vmatprep.subr.mxu0 0.0
    %863 = vmatpush1.msra.mxu0 0.0
    %864 = vmatprep.subr.mxu0 0.0
    %865 = vmatpush1.msra.mxu0 0.0
    %866 = vmatprep.subr.mxu0 0.0
    %867 = vmatpush1.msra.mxu0 0.0
    %868 = vmatprep.subr.mxu0 0.0
    %869 = vmatpush1.msra.mxu0 0.0
    %870 = vmatprep.subr.mxu0 0.0
    %871 = vmatpush1.msra.mxu0 0.0
    %872 = vmatprep.subr.mxu0 0.0
    %873 = vmatpush1.msra.mxu0 0.0
    %874 = vmatprep.subr.mxu0 0.0
    %875 = vmatpush1.msra.mxu0 0.0
    %876 = vmatprep.subr.mxu0 0.0
    %877 = vmatpush1.msra.mxu0 0.0
    %878 = vmatprep.subr.mxu0 0.0
    %879 = vmatpush1.msra.mxu0 0.0
    %880 = vmatprep.subr.mxu0 0.0
    %881 = vmatpush1.msra.mxu0 0.0
    %882 = vmatprep.subr.mxu0 0.0
    %883 = vmatpush1.msra.mxu0 %v648
    %884 = vmatprep.subr.mxu0 0.0
    %885 = vmatpush2.msra.mxu0 0.0
    %886 = vmatprep.subr.mxu0 0.0
    %887 = vmatpush2.msra.mxu0 0.0
    %888 = vmatprep.subr.mxu0 0.0
    %889 = vmatpush2.msra.mxu0 0.0
    %890 = vmatprep.subr.mxu0 0.0
    %891 = vmatpush2.msra.mxu0 0.0
    %892 = vmatprep.subr.mxu0 0.0
    %893 = vmatpush2.msra.mxu0 0.0
    %894 = vmatprep.subr.mxu0 0.0
    %895 = vmatpush2.msra.mxu0 0.0
    %896 = vmatprep.subr.mxu0 0.0
    %897 = vmatpush2.msra.mxu0 0.0
    %898 = vmatprep.subr.mxu0 0.0
    %899 = vmatpush2.msra.mxu0 0.0
    %900 = vmatprep.subr.mxu0 0.0
    %901 = vmatpush2.msra.mxu0 0.0
    %902 = vmatprep.subr.mxu0 0.0
    %903 = vmatpush2.msra.mxu0 0.0
    %904 = vmatprep.subr.mxu0 0.0
    %905 = vmatpush2.msra.mxu0 0.0
    %906 = vmatprep.subr.mxu0 0.0
    %907 = vmatpush2.msra.mxu0 0.0
    %908 = vmatprep.subr.mxu0 0.0
    %909 = vmatpush2.msra.mxu0 0.0
    %910 = vmatprep.subr.mxu0 0.0
    %911 = vmatpush2.msra.mxu0 0.0
    %912 = vmatprep.subr.mxu0 0.0
    %913 = vmatpush2.msra.mxu0 0.0
    %914 = vmatprep.subr.mxu0 0.0
    %915 = vmatpush2.msra.mxu0 0.0
    %916 = vmatprep.mubr.f32.mxu0 0.0
    %917 = vmatmul.mubr.f32.gmra.mxu0 %v850
    %v918 = vpop.f32.mrf.mxu0
    %v919 = vadd.f32 0.0, %v918
    %v920 = vpop.f32.mrf.mxu0
    %921 = vdwg.mxu0
    %v923 = vsel %vm775, %v439, 0
    %925 = vmatprep.subr.mxu0 0.0
    %926 = vmatpush1.msra.mxu0 0.0
    %927 = vmatprep.subr.mxu0 0.0
    %928 = vmatpush1.msra.mxu0 0.0
    %929 = vmatprep.subr.mxu0 0.0
    %930 = vmatpush1.msra.mxu0 0.0
    %931 = vmatprep.subr.mxu0 0.0
    %932 = vmatpush1.msra.mxu0 0.0
    %933 = vmatprep.subr.mxu0 0.0
    %934 = vmatpush1.msra.mxu0 0.0
    %935 = vmatprep.subr.mxu0 0.0
    %936 = vmatpush1.msra.mxu0 0.0
    %937 = vmatprep.subr.mxu0 0.0
    %938 = vmatpush1.msra.mxu0 0.0
    %939 = vmatprep.subr.mxu0 0.0
    %940 = vmatpush1.msra.mxu0 0.0
    %941 = vmatprep.subr.mxu0 0.0
    %942 = vmatpush1.msra.mxu0 0.0
    %943 = vmatprep.subr.mxu0 0.0
    %944 = vmatpush1.msra.mxu0 0.0
    %945 = vmatprep.subr.mxu0 0.0
    %946 = vmatpush1.msra.mxu0 0.0
    %947 = vmatprep.subr.mxu0 0.0
    %948 = vmatpush1.msra.mxu0 0.0
    %949 = vmatprep.subr.mxu0 0.0
    %950 = vmatpush1.msra.mxu0 0.0
    %951 = vmatprep.subr.mxu0 0.0
    %952 = vmatpush1.msra.mxu0 0.0
    %953 = vmatprep.subr.mxu0 0.0
    %954 = vmatpush1.msra.mxu0 0.0
    %955 = vmatprep.subr.mxu0 0.0
    %956 = vmatpush1.msra.mxu0 %v649
    %957 = vmatprep.subr.mxu0 0.0
    %958 = vmatpush2.msra.mxu0 0.0
    %959 = vmatprep.subr.mxu0 0.0
    %960 = vmatpush2.msra.mxu0 0.0
    %961 = vmatprep.subr.mxu0 0.0
    %962 = vmatpush2.msra.mxu0 0.0
    %963 = vmatprep.subr.mxu0 0.0
    %964 = vmatpush2.msra.mxu0 0.0
    %965 = vmatprep.subr.mxu0 0.0
    %966 = vmatpush2.msra.mxu0 0.0
    %967 = vmatprep.subr.mxu0 0.0
    %968 = vmatpush2.msra.mxu0 0.0
    %969 = vmatprep.subr.mxu0 0.0
    %970 = vmatpush2.msra.mxu0 0.0
    %971 = vmatprep.subr.mxu0 0.0
    %972 = vmatpush2.msra.mxu0 0.0
    %973 = vmatprep.subr.mxu0 0.0
    %974 = vmatpush2.msra.mxu0 0.0
    %975 = vmatprep.subr.mxu0 0.0
    %976 = vmatpush2.msra.mxu0 0.0
    %977 = vmatprep.subr.mxu0 0.0
    %978 = vmatpush2.msra.mxu0 0.0
    %979 = vmatprep.subr.mxu0 0.0
    %980 = vmatpush2.msra.mxu0 0.0
    %981 = vmatprep.subr.mxu0 0.0
    %982 = vmatpush2.msra.mxu0 0.0
    %983 = vmatprep.subr.mxu0 0.0
    %984 = vmatpush2.msra.mxu0 0.0
    %985 = vmatprep.subr.mxu0 0.0
    %986 = vmatpush2.msra.mxu0 0.0
    %987 = vmatprep.subr.mxu0 0.0
    %988 = vmatpush2.msra.mxu0 0.0
    %989 = vmatprep.mubr.f32.mxu0 0.0
    %990 = vmatmul.mubr.f32.gmra.mxu0 %v923
    %v991 = vpop.f32.mrf.mxu0
    %v992 = vadd.f32 0.0, %v991
    %v993 = vpop.f32.mrf.mxu0
    %994 = vdwg.mxu0
    %v996 = vsel %vm775, %v471, 0
    %998 = vmatprep.subr.mxu0 0.0
    %999 = vmatpush1.msra.mxu0 0.0
    %1000 = vmatprep.subr.mxu0 0.0
    %1001 = vmatpush1.msra.mxu0 0.0
    %1002 = vmatprep.subr.mxu0 0.0
    %1003 = vmatpush1.msra.mxu0 0.0
    %1004 = vmatprep.subr.mxu0 0.0
    %1005 = vmatpush1.msra.mxu0 0.0
    %1006 = vmatprep.subr.mxu0 0.0
    %1007 = vmatpush1.msra.mxu0 0.0
    %1008 = vmatprep.subr.mxu0 0.0
    %1009 = vmatpush1.msra.mxu0 0.0
    %1010 = vmatprep.subr.mxu0 0.0
    %1011 = vmatpush1.msra.mxu0 0.0
    %1012 = vmatprep.subr.mxu0 0.0
    %1013 = vmatpush1.msra.mxu0 0.0
    %1014 = vmatprep.subr.mxu0 0.0
    %1015 = vmatpush1.msra.mxu0 0.0
    %1016 = vmatprep.subr.mxu0 0.0
    %1017 = vmatpush1.msra.mxu0 0.0
    %1018 = vmatprep.subr.mxu0 0.0
    %1019 = vmatpush1.msra.mxu0 0.0
    %1020 = vmatprep.subr.mxu0 0.0
    %1021 = vmatpush1.msra.mxu0 0.0
    %1022 = vmatprep.subr.mxu0 0.0
    %1023 = vmatpush1.msra.mxu0 0.0
    %1024 = vmatprep.subr.mxu0 0.0
    %1025 = vmatpush1.msra.mxu0 0.0
    %1026 = vmatprep.subr.mxu0 0.0
    %1027 = vmatpush1.msra.mxu0 0.0
    %1028 = vmatprep.subr.mxu0 0.0
    %1029 = vmatpush1.msra.mxu0 %v650
    %1030 = vmatprep.subr.mxu0 0.0
    %1031 = vmatpush2.msra.mxu0 0.0
    %1032 = vmatprep.subr.mxu0 0.0
    %1033 = vmatpush2.msra.mxu0 0.0
    %1034 = vmatprep.subr.mxu0 0.0
    %1035 = vmatpush2.msra.mxu0 0.0
    %1036 = vmatprep.subr.mxu0 0.0
    %1037 = vmatpush2.msra.mxu0 0.0
    %1038 = vmatprep.subr.mxu0 0.0
    %1039 = vmatpush2.msra.mxu0 0.0
    %1040 = vmatprep.subr.mxu0 0.0
    %1041 = vmatpush2.msra.mxu0 0.0
    %1042 = vmatprep.subr.mxu0 0.0
    %1043 = vmatpush2.msra.mxu0 0.0
    %1044 = vmatprep.subr.mxu0 0.0
    %1045 = vmatpush2.msra.mxu0 0.0
    %1046 = vmatprep.subr.mxu0 0.0
    %1047 = vmatpush2.msra.mxu0 0.0
    %1048 = vmatprep.subr.mxu0 0.0
    %1049 = vmatpush2.msra.mxu0 0.0
    %1050 = vmatprep.subr.mxu0 0.0
    %1051 = vmatpush2.msra.mxu0 0.0
    %1052 = vmatprep.subr.mxu0 0.0
    %1053 = vmatpush2.msra.mxu0 0.0
    %1054 = vmatprep.subr.mxu0 0.0
    %1055 = vmatpush2.msra.mxu0 0.0
    %1056 = vmatprep.subr.mxu0 0.0
    %1057 = vmatpush2.msra.mxu0 0.0
    %1058 = vmatprep.subr.mxu0 0.0
    %1059 = vmatpush2.msra.mxu0 0.0
    %1060 = vmatprep.subr.mxu0 0.0
    %1061 = vmatpush2.msra.mxu0 0.0
    %1062 = vmatprep.mubr.f32.mxu0 0.0
    %1063 = vmatmul.mubr.f32.gmra.mxu0 %v996
    %v1064 = vpop.f32.mrf.mxu0
    %v1065 = vadd.f32 0.0, %v1064
    %v1066 = vpop.f32.mrf.mxu0
    %1067 = vdwg.mxu0
    %v1069 = vsel %vm775, %v503, 0
    %1071 = vmatprep.subr.mxu0 0.0
    %1072 = vmatpush1.msra.mxu0 0.0
    %1073 = vmatprep.subr.mxu0 0.0
    %1074 = vmatpush1.msra.mxu0 0.0
    %1075 = vmatprep.subr.mxu0 0.0
    %1076 = vmatpush1.msra.mxu0 0.0
    %1077 = vmatprep.subr.mxu0 0.0
    %1078 = vmatpush1.msra.mxu0 0.0
    %1079 = vmatprep.subr.mxu0 0.0
    %1080 = vmatpush1.msra.mxu0 0.0
    %1081 = vmatprep.subr.mxu0 0.0
    %1082 = vmatpush1.msra.mxu0 0.0
    %1083 = vmatprep.subr.mxu0 0.0
    %1084 = vmatpush1.msra.mxu0 0.0
    %1085 = vmatprep.subr.mxu0 0.0
    %1086 = vmatpush1.msra.mxu0 0.0
    %1087 = vmatprep.subr.mxu0 0.0
    %1088 = vmatpush1.msra.mxu0 0.0
    %1089 = vmatprep.subr.mxu0 0.0
    %1090 = vmatpush1.msra.mxu0 0.0
    %1091 = vmatprep.subr.mxu0 0.0
    %1092 = vmatpush1.msra.mxu0 0.0
    %1093 = vmatprep.subr.mxu0 0.0
    %1094 = vmatpush1.msra.mxu0 0.0
    %1095 = vmatprep.subr.mxu0 0.0
    %1096 = vmatpush1.msra.mxu0 0.0
    %1097 = vmatprep.subr.mxu0 0.0
    %1098 = vmatpush1.msra.mxu0 0.0
    %1099 = vmatprep.subr.mxu0 0.0
    %1100 = vmatpush1.msra.mxu0 0.0
    %1101 = vmatprep.subr.mxu0 0.0
    %1102 = vmatpush1.msra.mxu0 %v679
    %1103 = vmatprep.subr.mxu0 0.0
    %1104 = vmatpush2.msra.mxu0 0.0
    %1105 = vmatprep.subr.mxu0 0.0
    %1106 = vmatpush2.msra.mxu0 0.0
    %1107 = vmatprep.subr.mxu0 0.0
    %1108 = vmatpush2.msra.mxu0 0.0
    %1109 = vmatprep.subr.mxu0 0.0
    %1110 = vmatpush2.msra.mxu0 0.0
    %1111 = vmatprep.subr.mxu0 0.0
    %1112 = vmatpush2.msra.mxu0 0.0
    %1113 = vmatprep.subr.mxu0 0.0
    %1114 = vmatpush2.msra.mxu0 0.0
    %1115 = vmatprep.subr.mxu0 0.0
    %1116 = vmatpush2.msra.mxu0 0.0
    %1117 = vmatprep.subr.mxu0 0.0
    %1118 = vmatpush2.msra.mxu0 0.0
    %1119 = vmatprep.subr.mxu0 0.0
    %1120 = vmatpush2.msra.mxu0 0.0
    %1121 = vmatprep.subr.mxu0 0.0
    %1122 = vmatpush2.msra.mxu0 0.0
    %1123 = vmatprep.subr.mxu0 0.0
    %1124 = vmatpush2.msra.mxu0 0.0
    %1125 = vmatprep.subr.mxu0 0.0
    %1126 = vmatpush2.msra.mxu0 0.0
    %1127 = vmatprep.subr.mxu0 0.0
    %1128 = vmatpush2.msra.mxu0 0.0
    %1129 = vmatprep.subr.mxu0 0.0
    %1130 = vmatpush2.msra.mxu0 0.0
    %1131 = vmatprep.subr.mxu0 0.0
    %1132 = vmatpush2.msra.mxu0 0.0
    %1133 = vmatprep.subr.mxu0 0.0
    %1134 = vmatpush2.msra.mxu0 0.0
    %1135 = vmatprep.mubr.f32.mxu0 0.0
    %1136 = vmatmul.mubr.f32.gmra.mxu0 %v1069
    %v1137 = vpop.f32.mrf.mxu0
    %v1138 = vadd.f32 0.0, %v1137
    %v1139 = vpop.f32.mrf.mxu0
    %1140 = vdwg.mxu0
    %v1142 = vsel %vm775, %v535, 0
    %1144 = vmatprep.subr.mxu0 0.0
    %1145 = vmatpush1.msra.mxu0 0.0
    %1146 = vmatprep.subr.mxu0 0.0
    %1147 = vmatpush1.msra.mxu0 0.0
    %1148 = vmatprep.subr.mxu0 0.0
    %1149 = vmatpush1.msra.mxu0 0.0
    %1150 = vmatprep.subr.mxu0 0.0
    %1151 = vmatpush1.msra.mxu0 0.0
    %1152 = vmatprep.subr.mxu0 0.0
    %1153 = vmatpush1.msra.mxu0 0.0
    %1154 = vmatprep.subr.mxu0 0.0
    %1155 = vmatpush1.msra.mxu0 0.0
    %1156 = vmatprep.subr.mxu0 0.0
    %1157 = vmatpush1.msra.mxu0 0.0
    %1158 = vmatprep.subr.mxu0 0.0
    %1159 = vmatpush1.msra.mxu0 0.0
    %1160 = vmatprep.subr.mxu0 0.0
    %1161 = vmatpush1.msra.mxu0 0.0
    %1162 = vmatprep.subr.mxu0 0.0
    %1163 = vmatpush1.msra.mxu0 0.0
    %1164 = vmatprep.subr.mxu0 0.0
    %1165 = vmatpush1.msra.mxu0 0.0
    %1166 = vmatprep.subr.mxu0 0.0
    %1167 = vmatpush1.msra.mxu0 0.0
    %1168 = vmatprep.subr.mxu0 0.0
    %1169 = vmatpush1.msra.mxu0 0.0
    %1170 = vmatprep.subr.mxu0 0.0
    %1171 = vmatpush1.msra.mxu0 0.0
    %1172 = vmatprep.subr.mxu0 0.0
    %1173 = vmatpush1.msra.mxu0 0.0
    %1174 = vmatprep.subr.mxu0 0.0
    %1175 = vmatpush1.msra.mxu0 %v680
    %1176 = vmatprep.subr.mxu0 0.0
    %1177 = vmatpush2.msra.mxu0 0.0
    %1178 = vmatprep.subr.mxu0 0.0
    %1179 = vmatpush2.msra.mxu0 0.0
    %1180 = vmatprep.subr.mxu0 0.0
    %1181 = vmatpush2.msra.mxu0 0.0
    %1182 = vmatprep.subr.mxu0 0.0
    %1183 = vmatpush2.msra.mxu0 0.0
    %1184 = vmatprep.subr.mxu0 0.0
    %1185 = vmatpush2.msra.mxu0 0.0
    %1186 = vmatprep.subr.mxu0 0.0
    %1187 = vmatpush2.msra.mxu0 0.0
    %1188 = vmatprep.subr.mxu0 0.0
    %1189 = vmatpush2.msra.mxu0 0.0
    %1190 = vmatprep.subr.mxu0 0.0
    %1191 = vmatpush2.msra.mxu0 0.0
    %1192 = vmatprep.subr.mxu0 0.0
    %1193 = vmatpush2.msra.mxu0 0.0
    %1194 = vmatprep.subr.mxu0 0.0
    %1195 = vmatpush2.msra.mxu0 0.0
    %1196 = vmatprep.subr.mxu0 0.0
    %1197 = vmatpush2.msra.mxu0 0.0
    %1198 = vmatprep.subr.mxu0 0.0
    %1199 = vmatpush2.msra.mxu0 0.0
    %1200 = vmatprep.subr.mxu0 0.0
    %1201 = vmatpush2.msra.mxu0 0.0
    %1202 = vmatprep.subr.mxu0 0.0
    %1203 = vmatpush2.msra.mxu0 0.0
    %1204 = vmatprep.subr.mxu0 0.0
    %1205 = vmatpush2.msra.mxu0 0.0
    %1206 = vmatprep.subr.mxu0 0.0
    %1207 = vmatpush2.msra.mxu0 0.0
    %1208 = vmatprep.mubr.f32.mxu0 0.0
    %1209 = vmatmul.mubr.f32.gmra.mxu0 %v1142
    %v1210 = vpop.f32.mrf.mxu0
    %v1211 = vadd.f32 0.0, %v1210
    %v1212 = vpop.f32.mrf.mxu0
    %1213 = vdwg.mxu0
    %v1215 = vsel %vm775, %v567, 0
    %1217 = vmatprep.subr.mxu0 0.0
    %1218 = vmatpush1.msra.mxu0 0.0
    %1219 = vmatprep.subr.mxu0 0.0
    %1220 = vmatpush1.msra.mxu0 0.0
    %1221 = vmatprep.subr.mxu0 0.0
    %1222 = vmatpush1.msra.mxu0 0.0
    %1223 = vmatprep.subr.mxu0 0.0
    %1224 = vmatpush1.msra.mxu0 0.0
    %1225 = vmatprep.subr.mxu0 0.0
    %1226 = vmatpush1.msra.mxu0 0.0
    %1227 = vmatprep.subr.mxu0 0.0
    %1228 = vmatpush1.msra.mxu0 0.0
    %1229 = vmatprep.subr.mxu0 0.0
    %1230 = vmatpush1.msra.mxu0 0.0
    %1231 = vmatprep.subr.mxu0 0.0
    %1232 = vmatpush1.msra.mxu0 0.0
    %1233 = vmatprep.subr.mxu0 0.0
    %1234 = vmatpush1.msra.mxu0 0.0
    %1235 = vmatprep.subr.mxu0 0.0
    %1236 = vmatpush1.msra.mxu0 0.0
    %1237 = vmatprep.subr.mxu0 0.0
    %1238 = vmatpush1.msra.mxu0 0.0
    %1239 = vmatprep.subr.mxu0 0.0
    %1240 = vmatpush1.msra.mxu0 0.0
    %1241 = vmatprep.subr.mxu0 0.0
    %1242 = vmatpush1.msra.mxu0 0.0
    %1243 = vmatprep.subr.mxu0 0.0
    %1244 = vmatpush1.msra.mxu0 0.0
    %1245 = vmatprep.subr.mxu0 0.0
    %1246 = vmatpush1.msra.mxu0 0.0
    %1247 = vmatprep.subr.mxu0 0.0
    %1248 = vmatpush1.msra.mxu0 %v681
    %1249 = vmatprep.subr.mxu0 0.0
    %1250 = vmatpush2.msra.mxu0 0.0
    %1251 = vmatprep.subr.mxu0 0.0
    %1252 = vmatpush2.msra.mxu0 0.0
    %1253 = vmatprep.subr.mxu0 0.0
    %1254 = vmatpush2.msra.mxu0 0.0
    %1255 = vmatprep.subr.mxu0 0.0
    %1256 = vmatpush2.msra.mxu0 0.0
    %1257 = vmatprep.subr.mxu0 0.0
    %1258 = vmatpush2.msra.mxu0 0.0
    %1259 = vmatprep.subr.mxu0 0.0
    %1260 = vmatpush2.msra.mxu0 0.0
    %1261 = vmatprep.subr.mxu0 0.0
    %1262 = vmatpush2.msra.mxu0 0.0
    %1263 = vmatprep.subr.mxu0 0.0
    %1264 = vmatpush2.msra.mxu0 0.0
    %1265 = vmatprep.subr.mxu0 0.0
    %1266 = vmatpush2.msra.mxu0 0.0
    %1267 = vmatprep.subr.mxu0 0.0
    %1268 = vmatpush2.msra.mxu0 0.0
    %1269 = vmatprep.subr.mxu0 0.0
    %1270 = vmatpush2.msra.mxu0 0.0
    %1271 = vmatprep.subr.mxu0 0.0
    %1272 = vmatpush2.msra.mxu0 0.0
    %1273 = vmatprep.subr.mxu0 0.0
    %1274 = vmatpush2.msra.mxu0 0.0
    %1275 = vmatprep.subr.mxu0 0.0
    %1276 = vmatpush2.msra.mxu0 0.0
    %1277 = vmatprep.subr.mxu0 0.0
    %1278 = vmatpush2.msra.mxu0 0.0
    %1279 = vmatprep.subr.mxu0 0.0
    %1280 = vmatpush2.msra.mxu0 0.0
    %1281 = vmatprep.mubr.f32.mxu0 0.0
    %1282 = vmatmul.mubr.f32.gmra.mxu0 %v1215
    %v1283 = vpop.f32.mrf.mxu0
    %v1284 = vadd.f32 0.0, %v1283
    %v1285 = vpop.f32.mrf.mxu0
    %1286 = vdwg.mxu0
    %v1288 = vsel %vm775, %v599, 0
    %1290 = vmatprep.subr.mxu0 0.0
    %1291 = vmatpush1.msra.mxu0 0.0
    %1292 = vmatprep.subr.mxu0 0.0
    %1293 = vmatpush1.msra.mxu0 0.0
    %1294 = vmatprep.subr.mxu0 0.0
    %1295 = vmatpush1.msra.mxu0 0.0
    %1296 = vmatprep.subr.mxu0 0.0
    %1297 = vmatpush1.msra.mxu0 0.0
    %1298 = vmatprep.subr.mxu0 0.0
    %1299 = vmatpush1.msra.mxu0 0.0
    %1300 = vmatprep.subr.mxu0 0.0
    %1301 = vmatpush1.msra.mxu0 0.0
    %1302 = vmatprep.subr.mxu0 0.0
    %1303 = vmatpush1.msra.mxu0 0.0
    %1304 = vmatprep.subr.mxu0 0.0
    %1305 = vmatpush1.msra.mxu0 0.0
    %1306 = vmatprep.subr.mxu0 0.0
    %1307 = vmatpush1.msra.mxu0 0.0
    %1308 = vmatprep.subr.mxu0 0.0
    %1309 = vmatpush1.msra.mxu0 0.0
    %1310 = vmatprep.subr.mxu0 0.0
    %1311 = vmatpush1.msra.mxu0 0.0
    %1312 = vmatprep.subr.mxu0 0.0
    %1313 = vmatpush1.msra.mxu0 0.0
    %1314 = vmatprep.subr.mxu0 0.0
    %1315 = vmatpush1.msra.mxu0 0.0
    %1316 = vmatprep.subr.mxu0 0.0
    %1317 = vmatpush1.msra.mxu0 0.0
    %1318 = vmatprep.subr.mxu0 0.0
    %1319 = vmatpush1.msra.mxu0 0.0
    %1320 = vmatprep.subr.mxu0 0.0
    %1321 = vmatpush1.msra.mxu0 %v682
    %1322 = vmatprep.subr.mxu0 0.0
    %1323 = vmatpush2.msra.mxu0 0.0
    %1324 = vmatprep.subr.mxu0 0.0
    %1325 = vmatpush2.msra.mxu0 0.0
    %1326 = vmatprep.subr.mxu0 0.0
    %1327 = vmatpush2.msra.mxu0 0.0
    %1328 = vmatprep.subr.mxu0 0.0
    %1329 = vmatpush2.msra.mxu0 0.0
    %1330 = vmatprep.subr.mxu0 0.0
    %1331 = vmatpush2.msra.mxu0 0.0
    %1332 = vmatprep.subr.mxu0 0.0
    %1333 = vmatpush2.msra.mxu0 0.0
    %1334 = vmatprep.subr.mxu0 0.0
    %1335 = vmatpush2.msra.mxu0 0.0
    %1336 = vmatprep.subr.mxu0 0.0
    %1337 = vmatpush2.msra.mxu0 0.0
    %1338 = vmatprep.subr.mxu0 0.0
    %1339 = vmatpush2.msra.mxu0 0.0
    %1340 = vmatprep.subr.mxu0 0.0
    %1341 = vmatpush2.msra.mxu0 0.0
    %1342 = vmatprep.subr.mxu0 0.0
    %1343 = vmatpush2.msra.mxu0 0.0
    %1344 = vmatprep.subr.mxu0 0.0
    %1345 = vmatpush2.msra.mxu0 0.0
    %1346 = vmatprep.subr.mxu0 0.0
    %1347 = vmatpush2.msra.mxu0 0.0
    %1348 = vmatprep.subr.mxu0 0.0
    %1349 = vmatpush2.msra.mxu0 0.0
    %1350 = vmatprep.subr.mxu0 0.0
    %1351 = vmatpush2.msra.mxu0 0.0
    %1352 = vmatprep.subr.mxu0 0.0
    %1353 = vmatpush2.msra.mxu0 0.0
    %1354 = vmatprep.mubr.f32.mxu0 0.0
    %1355 = vmatmul.mubr.f32.gmra.mxu0 %v1288
    %v1356 = vpop.f32.mrf.mxu0
    %v1357 = vadd.f32 0.0, %v1356
    %v1358 = vpop.f32.mrf.mxu0
    %1359 = vdwg.mxu0
    %vm1360 = vcmask 130048
    %v1361 = vsel %vm1360, %v846, -inf
    %1362 = vmax.xlane.f32.xlu0 %v1361
    %v1363 = vpop.xlane.xlu0 %1362
    %v1364 = vsel %vm1360, %v919, -inf
    %1365 = vmax.xlane.f32.xlu0 %v1364
    %v1366 = vpop.xlane.xlu0 %1365
    %v1367 = vsel %vm1360, %v992, -inf
    %1368 = vmax.xlane.f32.xlu0 %v1367
    %v1369 = vpop.xlane.xlu0 %1368
    %v1370 = vsel %vm1360, %v1065, -inf
    %1371 = vmax.xlane.f32.xlu0 %v1370
    %v1372 = vpop.xlane.xlu0 %1371
    %v1373 = vsel %vm1360, %v1138, -inf
    %1374 = vmax.xlane.f32.xlu0 %v1373
    %v1375 = vpop.xlane.xlu0 %1374
    %v1376 = vsel %vm1360, %v1211, -inf
    %1377 = vmax.xlane.f32.xlu0 %v1376
    %v1378 = vpop.xlane.xlu0 %1377
    %v1379 = vsel %vm1360, %v1284, -inf
    %1380 = vmax.xlane.f32.xlu0 %v1379
    %v1381 = vpop.xlane.xlu0 %1380
    %v1382 = vsel %vm1360, %v1357, -inf
    %1383 = vmax.xlane.f32.xlu0 %v1382
    %v1384 = vpop.xlane.xlu0 %1383
    %v1385 = vsub.f32 %v846, %v1363
    %v1386 = vsub.f32 %v919, %v1366
    %v1387 = vsub.f32 %v992, %v1369
    %v1388 = vsub.f32 %v1065, %v1372
    %v1389 = vsub.f32 %v1138, %v1375
    %v1390 = vsub.f32 %v1211, %v1378
    %v1391 = vsub.f32 %v1284, %v1381
    %v1392 = vsub.f32 %v1357, %v1384
    %v1393 = vmul.f32 %v1385, 1.442695
    %v1394 = vpow.pop %v1393
    %v1395 = vmul.f32 %v1386, 1.442695
    %v1396 = vpow.pop %v1395
    %v1397 = vmul.f32 %v1387, 1.442695
    %v1398 = vpow.pop %v1397
    %v1399 = vmul.f32 %v1388, 1.442695
    %v1400 = vpow.pop %v1399
    %v1401 = vmul.f32 %v1389, 1.442695
    %v1402 = vpow.pop %v1401
    %v1403 = vmul.f32 %v1390, 1.442695
    %v1404 = vpow.pop %v1403
    %v1405 = vmul.f32 %v1391, 1.442695
    %v1406 = vpow.pop %v1405
    %v1407 = vmul.f32 %v1392, 1.442695
    %v1408 = vpow.pop %v1407
    %v1409 = vsel %vm1360, %v1394, 0.0
    %1410 = vadd.xlane.f32.xlu0 %v1409
    %v1411 = vpop.xlane.xlu0 %1410
    %v1412 = vsel %vm1360, %v1396, 0.0
    %1413 = vadd.xlane.f32.xlu0 %v1412
    %v1414 = vpop.xlane.xlu0 %1413
    %v1415 = vsel %vm1360, %v1398, 0.0
    %1416 = vadd.xlane.f32.xlu0 %v1415
    %v1417 = vpop.xlane.xlu0 %1416
    %v1418 = vsel %vm1360, %v1400, 0.0
    %1419 = vadd.xlane.f32.xlu0 %v1418
    %v1420 = vpop.xlane.xlu0 %1419
    %v1421 = vsel %vm1360, %v1402, 0.0
    %1422 = vadd.xlane.f32.xlu0 %v1421
    %v1423 = vpop.xlane.xlu0 %1422
    %v1424 = vsel %vm1360, %v1404, 0.0
    %1425 = vadd.xlane.f32.xlu0 %v1424
    %v1426 = vpop.xlane.xlu0 %1425
    %v1427 = vsel %vm1360, %v1406, 0.0
    %1428 = vadd.xlane.f32.xlu0 %v1427
    %v1429 = vpop.xlane.xlu0 %1428
    %v1430 = vsel %vm1360, %v1408, 0.0
    %1431 = vadd.xlane.f32.xlu0 %v1430
    %v1432 = vpop.xlane.xlu0 %1431
    %v1433 = vrcp.pop %v1411
    %v1434 = vrcp.pop %v1414
    %v1435 = vrcp.pop %v1417
    %v1436 = vrcp.pop %v1420
    %v1437 = vrcp.pop %v1423
    %v1438 = vrcp.pop %v1426
    %v1439 = vrcp.pop %v1429
    %v1440 = vrcp.pop %v1432
    %v1441 = vmul.f32 %v1394, %v1433
    %v1442 = vmul.f32 %v1396, %v1434
    %v1443 = vmul.f32 %v1398, %v1435
    %v1444 = vmul.f32 %v1400, %v1436
    %v1445 = vmul.f32 %v1402, %v1437
    %v1446 = vmul.f32 %v1404, %v1438
    %v1447 = vmul.f32 %v1406, %v1439
    %v1448 = vmul.f32 %v1408, %v1440
    %v1450 = vsel %vm1360, %v1441, 0
    %v1453 = vsel %vm1360, %v727, 0
    %1455 = vmatprep.subr.mxu0 0.0
    %1456 = vmatpush1.xpose.msra.mxu0 0.0
    %1457 = vmatprep.subr.mxu0 0.0
    %1458 = vmatpush1.xpose.msra.mxu0 0.0
    %1459 = vmatprep.subr.mxu0 0.0
    %1460 = vmatpush1.xpose.msra.mxu0 0.0
    %1461 = vmatprep.subr.mxu0 0.0
    %1462 = vmatpush1.xpose.msra.mxu0 0.0
    %1463 = vmatprep.subr.mxu0 0.0
    %1464 = vmatpush1.xpose.msra.mxu0 0.0
    %1465 = vmatprep.subr.mxu0 0.0
    %1466 = vmatpush1.xpose.msra.mxu0 0.0
    %1467 = vmatprep.subr.mxu0 0.0
    %1468 = vmatpush1.xpose.msra.mxu0 0.0
    %1469 = vmatprep.subr.mxu0 0.0
    %1470 = vmatpush1.xpose.msra.mxu0 0.0
    %1471 = vmatprep.subr.mxu0 0.0
    %1472 = vmatpush1.xpose.msra.mxu0 0.0
    %1473 = vmatprep.subr.mxu0 0.0
    %1474 = vmatpush1.xpose.msra.mxu0 0.0
    %1475 = vmatprep.subr.mxu0 0.0
    %1476 = vmatpush1.xpose.msra.mxu0 0.0
    %1477 = vmatprep.subr.mxu0 0.0
    %1478 = vmatpush1.xpose.msra.mxu0 0.0
    %1479 = vmatprep.subr.mxu0 0.0
    %1480 = vmatpush1.xpose.msra.mxu0 0.0
    %1481 = vmatprep.subr.mxu0 0.0
    %1482 = vmatpush1.xpose.msra.mxu0 0.0
    %1483 = vmatprep.subr.mxu0 0.0
    %1484 = vmatpush1.xpose.msra.mxu0 0.0
    %1485 = vmatprep.subr.mxu0 0.0
    %1486 = vmatpush1.xpose.msra.mxu0 %v1453
    %1487 = vmatprep.subr.mxu0 0.0
    %1488 = vmatpush2.xpose.msra.mxu0 0.0
    %1489 = vmatprep.subr.mxu0 0.0
    %1490 = vmatpush2.xpose.msra.mxu0 0.0
    %1491 = vmatprep.subr.mxu0 0.0
    %1492 = vmatpush2.xpose.msra.mxu0 0.0
    %1493 = vmatprep.subr.mxu0 0.0
    %1494 = vmatpush2.xpose.msra.mxu0 0.0
    %1495 = vmatprep.subr.mxu0 0.0
    %1496 = vmatpush2.xpose.msra.mxu0 0.0
    %1497 = vmatprep.subr.mxu0 0.0
    %1498 = vmatpush2.xpose.msra.mxu0 0.0
    %1499 = vmatprep.subr.mxu0 0.0
    %1500 = vmatpush2.xpose.msra.mxu0 0.0
    %1501 = vmatprep.subr.mxu0 0.0
    %1502 = vmatpush2.xpose.msra.mxu0 0.0
    %1503 = vmatprep.subr.mxu0 0.0
    %1504 = vmatpush2.xpose.msra.mxu0 0.0
    %1505 = vmatprep.subr.mxu0 0.0
    %1506 = vmatpush2.xpose.msra.mxu0 0.0
    %1507 = vmatprep.subr.mxu0 0.0
    %1508 = vmatpush2.xpose.msra.mxu0 0.0
    %1509 = vmatprep.subr.mxu0 0.0
    %1510 = vmatpush2.xpose.msra.mxu0 0.0
    %1511 = vmatprep.subr.mxu0 0.0
    %1512 = vmatpush2.xpose.msra.mxu0 0.0
    %1513 = vmatprep.subr.mxu0 0.0
    %1514 = vmatpush2.xpose.msra.mxu0 0.0
    %1515 = vmatprep.subr.mxu0 0.0
    %1516 = vmatpush2.xpose.msra.mxu0 0.0
    %1517 = vmatprep.subr.mxu0 0.0
    %1518 = vmatpush2.xpose.msra.mxu0 0.0
    %1519 = vmatprep.mubr.f32.mxu0 0.0
    %1520 = vmatmul.mubr.f32.gmra.mxu0 %v1450
    %v1521 = vpop.f32.mrf.mxu0
    %v1522 = vadd.f32 0.0, %v1521
    %v1523 = vpop.f32.mrf.mxu0
    %1524 = vdwg.mxu0
    %v1526 = vsel %vm1360, %v1442, 0
    %v1529 = vsel %vm1360, %v728, 0
    %1531 = vmatprep.subr.mxu0 0.0
    %1532 = vmatpush1.xpose.msra.mxu0 0.0
    %1533 = vmatprep.subr.mxu0 0.0
    %1534 = vmatpush1.xpose.msra.mxu0 0.0
    %1535 = vmatprep.subr.mxu0 0.0
    %1536 = vmatpush1.xpose.msra.mxu0 0.0
    %1537 = vmatprep.subr.mxu0 0.0
    %1538 = vmatpush1.xpose.msra.mxu0 0.0
    %1539 = vmatprep.subr.mxu0 0.0
    %1540 = vmatpush1.xpose.msra.mxu0 0.0
    %1541 = vmatprep.subr.mxu0 0.0
    %1542 = vmatpush1.xpose.msra.mxu0 0.0
    %1543 = vmatprep.subr.mxu0 0.0
    %1544 = vmatpush1.xpose.msra.mxu0 0.0
    %1545 = vmatprep.subr.mxu0 0.0
    %1546 = vmatpush1.xpose.msra.mxu0 0.0
    %1547 = vmatprep.subr.mxu0 0.0
    %1548 = vmatpush1.xpose.msra.mxu0 0.0
    %1549 = vmatprep.subr.mxu0 0.0
    %1550 = vmatpush1.xpose.msra.mxu0 0.0
    %1551 = vmatprep.subr.mxu0 0.0
    %1552 = vmatpush1.xpose.msra.mxu0 0.0
    %1553 = vmatprep.subr.mxu0 0.0
    %1554 = vmatpush1.xpose.msra.mxu0 0.0
    %1555 = vmatprep.subr.mxu0 0.0
    %1556 = vmatpush1.xpose.msra.mxu0 0.0
    %1557 = vmatprep.subr.mxu0 0.0
    %1558 = vmatpush1.xpose.msra.mxu0 0.0
    %1559 = vmatprep.subr.mxu0 0.0
    %1560 = vmatpush1.xpose.msra.mxu0 0.0
    %1561 = vmatprep.subr.mxu0 0.0
    %1562 = vmatpush1.xpose.msra.mxu0 %v1529
    %1563 = vmatprep.subr.mxu0 0.0
    %1564 = vmatpush2.xpose.msra.mxu0 0.0
    %1565 = vmatprep.subr.mxu0 0.0
    %1566 = vmatpush2.xpose.msra.mxu0 0.0
    %1567 = vmatprep.subr.mxu0 0.0
    %1568 = vmatpush2.xpose.msra.mxu0 0.0
    %1569 = vmatprep.subr.mxu0 0.0
    %1570 = vmatpush2.xpose.msra.mxu0 0.0
    %1571 = vmatprep.subr.mxu0 0.0
    %1572 = vmatpush2.xpose.msra.mxu0 0.0
    %1573 = vmatprep.subr.mxu0 0.0
    %1574 = vmatpush2.xpose.msra.mxu0 0.0
    %1575 = vmatprep.subr.mxu0 0.0
    %1576 = vmatpush2.xpose.msra.mxu0 0.0
    %1577 = vmatprep.subr.mxu0 0.0
    %1578 = vmatpush2.xpose.msra.mxu0 0.0
    %1579 = vmatprep.subr.mxu0 0.0
    %1580 = vmatpush2.xpose.msra.mxu0 0.0
    %1581 = vmatprep.subr.mxu0 0.0
    %1582 = vmatpush2.xpose.msra.mxu0 0.0
    %1583 = vmatprep.subr.mxu0 0.0
    %1584 = vmatpush2.xpose.msra.mxu0 0.0
    %1585 = vmatprep.subr.mxu0 0.0
    %1586 = vmatpush2.xpose.msra.mxu0 0.0
    %1587 = vmatprep.subr.mxu0 0.0
    %1588 = vmatpush2.xpose.msra.mxu0 0.0
    %1589 = vmatprep.subr.mxu0 0.0
    %1590 = vmatpush2.xpose.msra.mxu0 0.0
    %1591 = vmatprep.subr.mxu0 0.0
    %1592 = vmatpush2.xpose.msra.mxu0 0.0
    %1593 = vmatprep.subr.mxu0 0.0
    %1594 = vmatpush2.xpose.msra.mxu0 0.0
    %1595 = vmatprep.mubr.f32.mxu0 0.0
    %1596 = vmatmul.mubr.f32.gmra.mxu0 %v1526
    %v1597 = vpop.f32.mrf.mxu0
    %v1598 = vadd.f32 0.0, %v1597
    %v1599 = vpop.f32.mrf.mxu0
    %1600 = vdwg.mxu0
    %v1602 = vsel %vm1360, %v1443, 0
    %v1605 = vsel %vm1360, %v729, 0
    %1607 = vmatprep.subr.mxu0 0.0
    %1608 = vmatpush1.xpose.msra.mxu0 0.0
    %1609 = vmatprep.subr.mxu0 0.0
    %1610 = vmatpush1.xpose.msra.mxu0 0.0
    %1611 = vmatprep.subr.mxu0 0.0
    %1612 = vmatpush1.xpose.msra.mxu0 0.0
    %1613 = vmatprep.subr.mxu0 0.0
    %1614 = vmatpush1.xpose.msra.mxu0 0.0
    %1615 = vmatprep.subr.mxu0 0.0
    %1616 = vmatpush1.xpose.msra.mxu0 0.0
    %1617 = vmatprep.subr.mxu0 0.0
    %1618 = vmatpush1.xpose.msra.mxu0 0.0
    %1619 = vmatprep.subr.mxu0 0.0
    %1620 = vmatpush1.xpose.msra.mxu0 0.0
    %1621 = vmatprep.subr.mxu0 0.0
    %1622 = vmatpush1.xpose.msra.mxu0 0.0
    %1623 = vmatprep.subr.mxu0 0.0
    %1624 = vmatpush1.xpose.msra.mxu0 0.0
    %1625 = vmatprep.subr.mxu0 0.0
    %1626 = vmatpush1.xpose.msra.mxu0 0.0
    %1627 = vmatprep.subr.mxu0 0.0
    %1628 = vmatpush1.xpose.msra.mxu0 0.0
    %1629 = vmatprep.subr.mxu0 0.0
    %1630 = vmatpush1.xpose.msra.mxu0 0.0
    %1631 = vmatprep.subr.mxu0 0.0
    %1632 = vmatpush1.xpose.msra.mxu0 0.0
    %1633 = vmatprep.subr.mxu0 0.0
    %1634 = vmatpush1.xpose.msra.mxu0 0.0
    %1635 = vmatprep.subr.mxu0 0.0
    %1636 = vmatpush1.xpose.msra.mxu0 0.0
    %1637 = vmatprep.subr.mxu0 0.0
    %1638 = vmatpush1.xpose.msra.mxu0 %v1605
    %1639 = vmatprep.subr.mxu0 0.0
    %1640 = vmatpush2.xpose.msra.mxu0 0.0
    %1641 = vmatprep.subr.mxu0 0.0
    %1642 = vmatpush2.xpose.msra.mxu0 0.0
    %1643 = vmatprep.subr.mxu0 0.0
    %1644 = vmatpush2.xpose.msra.mxu0 0.0
    %1645 = vmatprep.subr.mxu0 0.0
    %1646 = vmatpush2.xpose.msra.mxu0 0.0
    %1647 = vmatprep.subr.mxu0 0.0
    %1648 = vmatpush2.xpose.msra.mxu0 0.0
    %1649 = vmatprep.subr.mxu0 0.0
    %1650 = vmatpush2.xpose.msra.mxu0 0.0
    %1651 = vmatprep.subr.mxu0 0.0
    %1652 = vmatpush2.xpose.msra.mxu0 0.0
    %1653 = vmatprep.subr.mxu0 0.0
    %1654 = vmatpush2.xpose.msra.mxu0 0.0
    %1655 = vmatprep.subr.mxu0 0.0
    %1656 = vmatpush2.xpose.msra.mxu0 0.0
    %1657 = vmatprep.subr.mxu0 0.0
    %1658 = vmatpush2.xpose.msra.mxu0 0.0
    %1659 = vmatprep.subr.mxu0 0.0
    %1660 = vmatpush2.xpose.msra.mxu0 0.0
    %1661 = vmatprep.subr.mxu0 0.0
    %1662 = vmatpush2.xpose.msra.mxu0 0.0
    %1663 = vmatprep.subr.mxu0 0.0
    %1664 = vmatpush2.xpose.msra.mxu0 0.0
    %1665 = vmatprep.subr.mxu0 0.0
    %1666 = vmatpush2.xpose.msra.mxu0 0.0
    %1667 = vmatprep.subr.mxu0 0.0
    %1668 = vmatpush2.xpose.msra.mxu0 0.0
    %1669 = vmatprep.subr.mxu0 0.0
    %1670 = vmatpush2.xpose.msra.mxu0 0.0
    %1671 = vmatprep.mubr.f32.mxu0 0.0
    %1672 = vmatmul.mubr.f32.gmra.mxu0 %v1602
    %v1673 = vpop.f32.mrf.mxu0
    %v1674 = vadd.f32 0.0, %v1673
    %v1675 = vpop.f32.mrf.mxu0
    %1676 = vdwg.mxu0
    %v1678 = vsel %vm1360, %v1444, 0
    %v1681 = vsel %vm1360, %v730, 0
    %1683 = vmatprep.subr.mxu0 0.0
    %1684 = vmatpush1.xpose.msra.mxu0 0.0
    %1685 = vmatprep.subr.mxu0 0.0
    %1686 = vmatpush1.xpose.msra.mxu0 0.0
    %1687 = vmatprep.subr.mxu0 0.0
    %1688 = vmatpush1.xpose.msra.mxu0 0.0
    %1689 = vmatprep.subr.mxu0 0.0
    %1690 = vmatpush1.xpose.msra.mxu0 0.0
    %1691 = vmatprep.subr.mxu0 0.0
    %1692 = vmatpush1.xpose.msra.mxu0 0.0
    %1693 = vmatprep.subr.mxu0 0.0
    %1694 = vmatpush1.xpose.msra.mxu0 0.0
    %1695 = vmatprep.subr.mxu0 0.0
    %1696 = vmatpush1.xpose.msra.mxu0 0.0
    %1697 = vmatprep.subr.mxu0 0.0
    %1698 = vmatpush1.xpose.msra.mxu0 0.0
    %1699 = vmatprep.subr.mxu0 0.0
    %1700 = vmatpush1.xpose.msra.mxu0 0.0
    %1701 = vmatprep.subr.mxu0 0.0
    %1702 = vmatpush1.xpose.msra.mxu0 0.0
    %1703 = vmatprep.subr.mxu0 0.0
    %1704 = vmatpush1.xpose.msra.mxu0 0.0
    %1705 = vmatprep.subr.mxu0 0.0
    %1706 = vmatpush1.xpose.msra.mxu0 0.0
    %1707 = vmatprep.subr.mxu0 0.0
    %1708 = vmatpush1.xpose.msra.mxu0 0.0
    %1709 = vmatprep.subr.mxu0 0.0
    %1710 = vmatpush1.xpose.msra.mxu0 0.0
    %1711 = vmatprep.subr.mxu0 0.0
    %1712 = vmatpush1.xpose.msra.mxu0 0.0
    %1713 = vmatprep.subr.mxu0 0.0
    %1714 = vmatpush1.xpose.msra.mxu0 %v1681
    %1715 = vmatprep.subr.mxu0 0.0
    %1716 = vmatpush2.xpose.msra.mxu0 0.0
    %1717 = vmatprep.subr.mxu0 0.0
    %1718 = vmatpush2.xpose.msra.mxu0 0.0
    %1719 = vmatprep.subr.mxu0 0.0
    %1720 = vmatpush2.xpose.msra.mxu0 0.0
    %1721 = vmatprep.subr.mxu0 0.0
    %1722 = vmatpush2.xpose.msra.mxu0 0.0
    %1723 = vmatprep.subr.mxu0 0.0
    %1724 = vmatpush2.xpose.msra.mxu0 0.0
    %1725 = vmatprep.subr.mxu0 0.0
    %1726 = vmatpush2.xpose.msra.mxu0 0.0
    %1727 = vmatprep.subr.mxu0 0.0
    %1728 = vmatpush2.xpose.msra.mxu0 0.0
    %1729 = vmatprep.subr.mxu0 0.0
    %1730 = vmatpush2.xpose.msra.mxu0 0.0
    %1731 = vmatprep.subr.mxu0 0.0
    %1732 = vmatpush2.xpose.msra.mxu0 0.0
    %1733 = vmatprep.subr.mxu0 0.0
    %1734 = vmatpush2.xpose.msra.mxu0 0.0
    %1735 = vmatprep.subr.mxu0 0.0
    %1736 = vmatpush2.xpose.msra.mxu0 0.0
    %1737 = vmatprep.subr.mxu0 0.0
    %1738 = vmatpush2.xpose.msra.mxu0 0.0
    %1739 = vmatprep.subr.mxu0 0.0
    %1740 = vmatpush2.xpose.msra.mxu0 0.0
    %1741 = vmatprep.subr.mxu0 0.0
    %1742 = vmatpush2.xpose.msra.mxu0 0.0
    %1743 = vmatprep.subr.mxu0 0.0
    %1744 = vmatpush2.xpose.msra.mxu0 0.0
    %1745 = vmatprep.subr.mxu0 0.0
    %1746 = vmatpush2.xpose.msra.mxu0 0.0
    %1747 = vmatprep.mubr.f32.mxu0 0.0
    %1748 = vmatmul.mubr.f32.gmra.mxu0 %v1678
    %v1749 = vpop.f32.mrf.mxu0
    %v1750 = vadd.f32 0.0, %v1749
    %v1751 = vpop.f32.mrf.mxu0
    %1752 = vdwg.mxu0
    %v1754 = vsel %vm1360, %v1445, 0
    %v1757 = vsel %vm1360, %v759, 0
    %1759 = vmatprep.subr.mxu0 0.0
    %1760 = vmatpush1.xpose.msra.mxu0 0.0
    %1761 = vmatprep.subr.mxu0 0.0
    %1762 = vmatpush1.xpose.msra.mxu0 0.0
    %1763 = vmatprep.subr.mxu0 0.0
    %1764 = vmatpush1.xpose.msra.mxu0 0.0
    %1765 = vmatprep.subr.mxu0 0.0
    %1766 = vmatpush1.xpose.msra.mxu0 0.0
    %1767 = vmatprep.subr.mxu0 0.0
    %1768 = vmatpush1.xpose.msra.mxu0 0.0
    %1769 = vmatprep.subr.mxu0 0.0
    %1770 = vmatpush1.xpose.msra.mxu0 0.0
    %1771 = vmatprep.subr.mxu0 0.0
    %1772 = vmatpush1.xpose.msra.mxu0 0.0
    %1773 = vmatprep.subr.mxu0 0.0
    %1774 = vmatpush1.xpose.msra.mxu0 0.0
    %1775 = vmatprep.subr.mxu0 0.0
    %1776 = vmatpush1.xpose.msra.mxu0 0.0
    %1777 = vmatprep.subr.mxu0 0.0
    %1778 = vmatpush1.xpose.msra.mxu0 0.0
    %1779 = vmatprep.subr.mxu0 0.0
    %1780 = vmatpush1.xpose.msra.mxu0 0.0
    %1781 = vmatprep.subr.mxu0 0.0
    %1782 = vmatpush1.xpose.msra.mxu0 0.0
    %1783 = vmatprep.subr.mxu0 0.0
    %1784 = vmatpush1.xpose.msra.mxu0 0.0
    %1785 = vmatprep.subr.mxu0 0.0
    %1786 = vmatpush1.xpose.msra.mxu0 0.0
    %1787 = vmatprep.subr.mxu0 0.0
    %1788 = vmatpush1.xpose.msra.mxu0 0.0
    %1789 = vmatprep.subr.mxu0 0.0
    %1790 = vmatpush1.xpose.msra.mxu0 %v1757
    %1791 = vmatprep.subr.mxu0 0.0
    %1792 = vmatpush2.xpose.msra.mxu0 0.0
    %1793 = vmatprep.subr.mxu0 0.0
    %1794 = vmatpush2.xpose.msra.mxu0 0.0
    %1795 = vmatprep.subr.mxu0 0.0
    %1796 = vmatpush2.xpose.msra.mxu0 0.0
    %1797 = vmatprep.subr.mxu0 0.0
    %1798 = vmatpush2.xpose.msra.mxu0 0.0
    %1799 = vmatprep.subr.mxu0 0.0
    %1800 = vmatpush2.xpose.msra.mxu0 0.0
    %1801 = vmatprep.subr.mxu0 0.0
    %1802 = vmatpush2.xpose.msra.mxu0 0.0
    %1803 = vmatprep.subr.mxu0 0.0
    %1804 = vmatpush2.xpose.msra.mxu0 0.0
    %1805 = vmatprep.subr.mxu0 0.0
    %1806 = vmatpush2.xpose.msra.mxu0 0.0
    %1807 = vmatprep.subr.mxu0 0.0
    %1808 = vmatpush2.xpose.msra.mxu0 0.0
    %1809 = vmatprep.subr.mxu0 0.0
    %1810 = vmatpush2.xpose.msra.mxu0 0.0
    %1811 = vmatprep.subr.mxu0 0.0
    %1812 = vmatpush2.xpose.msra.mxu0 0.0
    %1813 = vmatprep.subr.mxu0 0.0
    %1814 = vmatpush2.xpose.msra.mxu0 0.0
    %1815 = vmatprep.subr.mxu0 0.0
    %1816 = vmatpush2.xpose.msra.mxu0 0.0
    %1817 = vmatprep.subr.mxu0 0.0
    %1818 = vmatpush2.xpose.msra.mxu0 0.0
    %1819 = vmatprep.subr.mxu0 0.0
    %1820 = vmatpush2.xpose.msra.mxu0 0.0
    %1821 = vmatprep.subr.mxu0 0.0
    %1822 = vmatpush2.xpose.msra.mxu0 0.0
    %1823 = vmatprep.mubr.f32.mxu0 0.0
    %1824 = vmatmul.mubr.f32.gmra.mxu0 %v1754
    %v1825 = vpop.f32.mrf.mxu0
    %v1826 = vadd.f32 0.0, %v1825
    %v1827 = vpop.f32.mrf.mxu0
    %1828 = vdwg.mxu0
    %v1830 = vsel %vm1360, %v1446, 0
    %v1833 = vsel %vm1360, %v760, 0
    %1835 = vmatprep.subr.mxu0 0.0
    %1836 = vmatpush1.xpose.msra.mxu0 0.0
    %1837 = vmatprep.subr.mxu0 0.0
    %1838 = vmatpush1.xpose.msra.mxu0 0.0
    %1839 = vmatprep.subr.mxu0 0.0
    %1840 = vmatpush1.xpose.msra.mxu0 0.0
    %1841 = vmatprep.subr.mxu0 0.0
    %1842 = vmatpush1.xpose.msra.mxu0 0.0
    %1843 = vmatprep.subr.mxu0 0.0
    %1844 = vmatpush1.xpose.msra.mxu0 0.0
    %1845 = vmatprep.subr.mxu0 0.0
    %1846 = vmatpush1.xpose.msra.mxu0 0.0
    %1847 = vmatprep.subr.mxu0 0.0
    %1848 = vmatpush1.xpose.msra.mxu0 0.0
    %1849 = vmatprep.subr.mxu0 0.0
    %1850 = vmatpush1.xpose.msra.mxu0 0.0
    %1851 = vmatprep.subr.mxu0 0.0
    %1852 = vmatpush1.xpose.msra.mxu0 0.0
    %1853 = vmatprep.subr.mxu0 0.0
    %1854 = vmatpush1.xpose.msra.mxu0 0.0
    %1855 = vmatprep.subr.mxu0 0.0
    %1856 = vmatpush1.xpose.msra.mxu0 0.0
    %1857 = vmatprep.subr.mxu0 0.0
    %1858 = vmatpush1.xpose.msra.mxu0 0.0
    %1859 = vmatprep.subr.mxu0 0.0
    %1860 = vmatpush1.xpose.msra.mxu0 0.0
    %1861 = vmatprep.subr.mxu0 0.0
    %1862 = vmatpush1.xpose.msra.mxu0 0.0
    %1863 = vmatprep.subr.mxu0 0.0
    %1864 = vmatpush1.xpose.msra.mxu0 0.0
    %1865 = vmatprep.subr.mxu0 0.0
    %1866 = vmatpush1.xpose.msra.mxu0 %v1833
    %1867 = vmatprep.subr.mxu0 0.0
    %1868 = vmatpush2.xpose.msra.mxu0 0.0
    %1869 = vmatprep.subr.mxu0 0.0
    %1870 = vmatpush2.xpose.msra.mxu0 0.0
    %1871 = vmatprep.subr.mxu0 0.0
    %1872 = vmatpush2.xpose.msra.mxu0 0.0
    %1873 = vmatprep.subr.mxu0 0.0
    %1874 = vmatpush2.xpose.msra.mxu0 0.0
    %1875 = vmatprep.subr.mxu0 0.0
    %1876 = vmatpush2.xpose.msra.mxu0 0.0
    %1877 = vmatprep.subr.mxu0 0.0
    %1878 = vmatpush2.xpose.msra.mxu0 0.0
    %1879 = vmatprep.subr.mxu0 0.0
    %1880 = vmatpush2.xpose.msra.mxu0 0.0
    %1881 = vmatprep.subr.mxu0 0.0
    %1882 = vmatpush2.xpose.msra.mxu0 0.0
    %1883 = vmatprep.subr.mxu0 0.0
    %1884 = vmatpush2.xpose.msra.mxu0 0.0
    %1885 = vmatprep.subr.mxu0 0.0
    %1886 = vmatpush2.xpose.msra.mxu0 0.0
    %1887 = vmatprep.subr.mxu0 0.0
    %1888 = vmatpush2.xpose.msra.mxu0 0.0
    %1889 = vmatprep.subr.mxu0 0.0
    %1890 = vmatpush2.xpose.msra.mxu0 0.0
    %1891 = vmatprep.subr.mxu0 0.0
    %1892 = vmatpush2.xpose.msra.mxu0 0.0
    %1893 = vmatprep.subr.mxu0 0.0
    %1894 = vmatpush2.xpose.msra.mxu0 0.0
    %1895 = vmatprep.subr.mxu0 0.0
    %1896 = vmatpush2.xpose.msra.mxu0 0.0
    %1897 = vmatprep.subr.mxu0 0.0
    %1898 = vmatpush2.xpose.msra.mxu0 0.0
    %1899 = vmatprep.mubr.f32.mxu0 0.0
    %1900 = vmatmul.mubr.f32.gmra.mxu0 %v1830
    %v1901 = vpop.f32.mrf.mxu0
    %v1902 = vadd.f32 0.0, %v1901
    %v1903 = vpop.f32.mrf.mxu0
    %1904 = vdwg.mxu0
    %v1906 = vsel %vm1360, %v1447, 0
    %v1909 = vsel %vm1360, %v761, 0
    %1911 = vmatprep.subr.mxu0 0.0
    %1912 = vmatpush1.xpose.msra.mxu0 0.0
    %1913 = vmatprep.subr.mxu0 0.0
    %1914 = vmatpush1.xpose.msra.mxu0 0.0
    %1915 = vmatprep.subr.mxu0 0.0
    %1916 = vmatpush1.xpose.msra.mxu0 0.0
    %1917 = vmatprep.subr.mxu0 0.0
    %1918 = vmatpush1.xpose.msra.mxu0 0.0
    %1919 = vmatprep.subr.mxu0 0.0
    %1920 = vmatpush1.xpose.msra.mxu0 0.0
    %1921 = vmatprep.subr.mxu0 0.0
    %1922 = vmatpush1.xpose.msra.mxu0 0.0
    %1923 = vmatprep.subr.mxu0 0.0
    %1924 = vmatpush1.xpose.msra.mxu0 0.0
    %1925 = vmatprep.subr.mxu0 0.0
    %1926 = vmatpush1.xpose.msra.mxu0 0.0
    %1927 = vmatprep.subr.mxu0 0.0
    %1928 = vmatpush1.xpose.msra.mxu0 0.0
    %1929 = vmatprep.subr.mxu0 0.0
    %1930 = vmatpush1.xpose.msra.mxu0 0.0
    %1931 = vmatprep.subr.mxu0 0.0
    %1932 = vmatpush1.xpose.msra.mxu0 0.0
    %1933 = vmatprep.subr.mxu0 0.0
    %1934 = vmatpush1.xpose.msra.mxu0 0.0
    %1935 = vmatprep.subr.mxu0 0.0
    %1936 = vmatpush1.xpose.msra.mxu0 0.0
    %1937 = vmatprep.subr.mxu0 0.0
    %1938 = vmatpush1.xpose.msra.mxu0 0.0
    %1939 = vmatprep.subr.mxu0 0.0
    %1940 = vmatpush1.xpose.msra.mxu0 0.0
    %1941 = vmatprep.subr.mxu0 0.0
    %1942 = vmatpush1.xpose.msra.mxu0 %v1909
    %1943 = vmatprep.subr.mxu0 0.0
    %1944 = vmatpush2.xpose.msra.mxu0 0.0
    %1945 = vmatprep.subr.mxu0 0.0
    %1946 = vmatpush2.xpose.msra.mxu0 0.0
    %1947 = vmatprep.subr.mxu0 0.0
    %1948 = vmatpush2.xpose.msra.mxu0 0.0
    %1949 = vmatprep.subr.mxu0 0.0
    %1950 = vmatpush2.xpose.msra.mxu0 0.0
    %1951 = vmatprep.subr.mxu0 0.0
    %1952 = vmatpush2.xpose.msra.mxu0 0.0
    %1953 = vmatprep.subr.mxu0 0.0
    %1954 = vmatpush2.xpose.msra.mxu0 0.0
    %1955 = vmatprep.subr.mxu0 0.0
    %1956 = vmatpush2.xpose.msra.mxu0 0.0
    %1957 = vmatprep.subr.mxu0 0.0
    %1958 = vmatpush2.xpose.msra.mxu0 0.0
    %1959 = vmatprep.subr.mxu0 0.0
    %1960 = vmatpush2.xpose.msra.mxu0 0.0
    %1961 = vmatprep.subr.mxu0 0.0
    %1962 = vmatpush2.xpose.msra.mxu0 0.0
    %1963 = vmatprep.subr.mxu0 0.0
    %1964 = vmatpush2.xpose.msra.mxu0 0.0
    %1965 = vmatprep.subr.mxu0 0.0
    %1966 = vmatpush2.xpose.msra.mxu0 0.0
    %1967 = vmatprep.subr.mxu0 0.0
    %1968 = vmatpush2.xpose.msra.mxu0 0.0
    %1969 = vmatprep.subr.mxu0 0.0
    %1970 = vmatpush2.xpose.msra.mxu0 0.0
    %1971 = vmatprep.subr.mxu0 0.0
    %1972 = vmatpush2.xpose.msra.mxu0 0.0
    %1973 = vmatprep.subr.mxu0 0.0
    %1974 = vmatpush2.xpose.msra.mxu0 0.0
    %1975 = vmatprep.mubr.f32.mxu0 0.0
    %1976 = vmatmul.mubr.f32.gmra.mxu0 %v1906
    %v1977 = vpop.f32.mrf.mxu0
    %v1978 = vadd.f32 0.0, %v1977
    %v1979 = vpop.f32.mrf.mxu0
    %1980 = vdwg.mxu0
    %v1982 = vsel %vm1360, %v1448, 0
    %v1985 = vsel %vm1360, %v762, 0
    %1987 = vmatprep.subr.mxu0 0.0
    %1988 = vmatpush1.xpose.msra.mxu0 0.0
    %1989 = vmatprep.subr.mxu0 0.0
    %1990 = vmatpush1.xpose.msra.mxu0 0.0
    %1991 = vmatprep.subr.mxu0 0.0
    %1992 = vmatpush1.xpose.msra.mxu0 0.0
    %1993 = vmatprep.subr.mxu0 0.0
    %1994 = vmatpush1.xpose.msra.mxu0 0.0
    %1995 = vmatprep.subr.mxu0 0.0
    %1996 = vmatpush1.xpose.msra.mxu0 0.0
    %1997 = vmatprep.subr.mxu0 0.0
    %1998 = vmatpush1.xpose.msra.mxu0 0.0
    %1999 = vmatprep.subr.mxu0 0.0
    %2000 = vmatpush1.xpose.msra.mxu0 0.0
    %2001 = vmatprep.subr.mxu0 0.0
    %2002 = vmatpush1.xpose.msra.mxu0 0.0
    %2003 = vmatprep.subr.mxu0 0.0
    %2004 = vmatpush1.xpose.msra.mxu0 0.0
    %2005 = vmatprep.subr.mxu0 0.0
    %2006 = vmatpush1.xpose.msra.mxu0 0.0
    %2007 = vmatprep.subr.mxu0 0.0
    %2008 = vmatpush1.xpose.msra.mxu0 0.0
    %2009 = vmatprep.subr.mxu0 0.0
    %2010 = vmatpush1.xpose.msra.mxu0 0.0
    %2011 = vmatprep.subr.mxu0 0.0
    %2012 = vmatpush1.xpose.msra.mxu0 0.0
    %2013 = vmatprep.subr.mxu0 0.0
    %2014 = vmatpush1.xpose.msra.mxu0 0.0
    %2015 = vmatprep.subr.mxu0 0.0
    %2016 = vmatpush1.xpose.msra.mxu0 0.0
    %2017 = vmatprep.subr.mxu0 0.0
    %2018 = vmatpush1.xpose.msra.mxu0 %v1985
    %2019 = vmatprep.subr.mxu0 0.0
    %2020 = vmatpush2.xpose.msra.mxu0 0.0
    %2021 = vmatprep.subr.mxu0 0.0
    %2022 = vmatpush2.xpose.msra.mxu0 0.0
    %2023 = vmatprep.subr.mxu0 0.0
    %2024 = vmatpush2.xpose.msra.mxu0 0.0
    %2025 = vmatprep.subr.mxu0 0.0
    %2026 = vmatpush2.xpose.msra.mxu0 0.0
    %2027 = vmatprep.subr.mxu0 0.0
    %2028 = vmatpush2.xpose.msra.mxu0 0.0
    %2029 = vmatprep.subr.mxu0 0.0
    %2030 = vmatpush2.xpose.msra.mxu0 0.0
    %2031 = vmatprep.subr.mxu0 0.0
    %2032 = vmatpush2.xpose.msra.mxu0 0.0
    %2033 = vmatprep.subr.mxu0 0.0
    %2034 = vmatpush2.xpose.msra.mxu0 0.0
    %2035 = vmatprep.subr.mxu0 0.0
    %2036 = vmatpush2.xpose.msra.mxu0 0.0
    %2037 = vmatprep.subr.mxu0 0.0
    %2038 = vmatpush2.xpose.msra.mxu0 0.0
    %2039 = vmatprep.subr.mxu0 0.0
    %2040 = vmatpush2.xpose.msra.mxu0 0.0
    %2041 = vmatprep.subr.mxu0 0.0
    %2042 = vmatpush2.xpose.msra.mxu0 0.0
    %2043 = vmatprep.subr.mxu0 0.0
    %2044 = vmatpush2.xpose.msra.mxu0 0.0
    %2045 = vmatprep.subr.mxu0 0.0
    %2046 = vmatpush2.xpose.msra.mxu0 0.0
    %2047 = vmatprep.subr.mxu0 0.0
    %2048 = vmatpush2.xpose.msra.mxu0 0.0
    %2049 = vmatprep.subr.mxu0 0.0
    %2050 = vmatpush2.xpose.msra.mxu0 0.0
    %2051 = vmatprep.mubr.f32.mxu0 0.0
    %2052 = vmatmul.mubr.f32.gmra.mxu0 %v1982
    %v2053 = vpop.f32.mrf.mxu0
    %v2054 = vadd.f32 0.0, %v2053
    %v2055 = vpop.f32.mrf.mxu0
    %2056 = vdwg.mxu0
    %2057 = vxpose.xlu0.b32.start [1/16] %v1522, 128
    %2058 = vxpose.xlu0.b32.cont [2/16] 0.0, 128
    %2059 = vxpose.xlu0.b32.cont [3/16] 0.0, 128
    %2060 = vxpose.xlu0.b32.cont [4/16] 0.0, 128
    %2061 = vxpose.xlu0.b32.cont [5/16] 0.0, 128
    %2062 = vxpose.xlu0.b32.cont [6/16] 0.0, 128
    %2063 = vxpose.xlu0.b32.cont [7/16] 0.0, 128
    %2064 = vxpose.xlu0.b32.cont [8/16] 0.0, 128
    %2065 = vxpose.xlu0.b32.cont [9/16] 0.0, 128
    %2066 = vxpose.xlu0.b32.cont [10/16] 0.0, 128
    %2067 = vxpose.xlu0.b32.cont [11/16] 0.0, 128
    %2068 = vxpose.xlu0.b32.cont [12/16] 0.0, 128
    %2069 = vxpose.xlu0.b32.cont [13/16] 0.0, 128
    %2070 = vxpose.xlu0.b32.cont [14/16] 0.0, 128
    %2071 = vxpose.xlu0.b32.cont [15/16] 0.0, 128
    %2072 = vxpose.xlu0.b32.end [16/16] 0.0, 128
    %v2073 = vpop.trf.xlu0
    %v2074 = vpop.trf.xlu0
    %v2075 = vpop.trf.xlu0
    %v2076 = vpop.trf.xlu0
    %v2077 = vpop.trf.xlu0
    %v2078 = vpop.trf.xlu0
    %v2079 = vpop.trf.xlu0
    %v2080 = vpop.trf.xlu0
    %v2081 = vpop.trf.xlu0
    %v2082 = vpop.trf.xlu0
    %v2083 = vpop.trf.xlu0
    %v2084 = vpop.trf.xlu0
    %v2085 = vpop.trf.xlu0
    %v2086 = vpop.trf.xlu0
    %v2087 = vpop.trf.xlu0
    %v2088 = vpop.trf.xlu0
    %2089 = vxpose.xlu0.b32.start [1/16] %v1598, 128
    %2090 = vxpose.xlu0.b32.cont [2/16] 0.0, 128
    %2091 = vxpose.xlu0.b32.cont [3/16] 0.0, 128
    %2092 = vxpose.xlu0.b32.cont [4/16] 0.0, 128
    %2093 = vxpose.xlu0.b32.cont [5/16] 0.0, 128
    %2094 = vxpose.xlu0.b32.cont [6/16] 0.0, 128
    %2095 = vxpose.xlu0.b32.cont [7/16] 0.0, 128
    %2096 = vxpose.xlu0.b32.cont [8/16] 0.0, 128
    %2097 = vxpose.xlu0.b32.cont [9/16] 0.0, 128
    %2098 = vxpose.xlu0.b32.cont [10/16] 0.0, 128
    %2099 = vxpose.xlu0.b32.cont [11/16] 0.0, 128
    %2100 = vxpose.xlu0.b32.cont [12/16] 0.0, 128
    %2101 = vxpose.xlu0.b32.cont [13/16] 0.0, 128
    %2102 = vxpose.xlu0.b32.cont [14/16] 0.0, 128
    %2103 = vxpose.xlu0.b32.cont [15/16] 0.0, 128
    %2104 = vxpose.xlu0.b32.end [16/16] 0.0, 128
    %v2105 = vpop.trf.xlu0
    %v2106 = vpop.trf.xlu0
    %v2107 = vpop.trf.xlu0
    %v2108 = vpop.trf.xlu0
    %v2109 = vpop.trf.xlu0
    %v2110 = vpop.trf.xlu0
    %v2111 = vpop.trf.xlu0
    %v2112 = vpop.trf.xlu0
    %v2113 = vpop.trf.xlu0
    %v2114 = vpop.trf.xlu0
    %v2115 = vpop.trf.xlu0
    %v2116 = vpop.trf.xlu0
    %v2117 = vpop.trf.xlu0
    %v2118 = vpop.trf.xlu0
    %v2119 = vpop.trf.xlu0
    %v2120 = vpop.trf.xlu0
    %2121 = vxpose.xlu0.b32.start [1/16] %v1674, 128
    %2122 = vxpose.xlu0.b32.cont [2/16] 0.0, 128
    %2123 = vxpose.xlu0.b32.cont [3/16] 0.0, 128
    %2124 = vxpose.xlu0.b32.cont [4/16] 0.0, 128
    %2125 = vxpose.xlu0.b32.cont [5/16] 0.0, 128
    %2126 = vxpose.xlu0.b32.cont [6/16] 0.0, 128
    %2127 = vxpose.xlu0.b32.cont [7/16] 0.0, 128
    %2128 = vxpose.xlu0.b32.cont [8/16] 0.0, 128
    %2129 = vxpose.xlu0.b32.cont [9/16] 0.0, 128
    %2130 = vxpose.xlu0.b32.cont [10/16] 0.0, 128
    %2131 = vxpose.xlu0.b32.cont [11/16] 0.0, 128
    %2132 = vxpose.xlu0.b32.cont [12/16] 0.0, 128
    %2133 = vxpose.xlu0.b32.cont [13/16] 0.0, 128
    %2134 = vxpose.xlu0.b32.cont [14/16] 0.0, 128
    %2135 = vxpose.xlu0.b32.cont [15/16] 0.0, 128
    %2136 = vxpose.xlu0.b32.end [16/16] 0.0, 128
    %v2137 = vpop.trf.xlu0
    %v2138 = vpop.trf.xlu0
    %v2139 = vpop.trf.xlu0
    %v2140 = vpop.trf.xlu0
    %v2141 = vpop.trf.xlu0
    %v2142 = vpop.trf.xlu0
    %v2143 = vpop.trf.xlu0
    %v2144 = vpop.trf.xlu0
    %v2145 = vpop.trf.xlu0
    %v2146 = vpop.trf.xlu0
    %v2147 = vpop.trf.xlu0
    %v2148 = vpop.trf.xlu0
    %v2149 = vpop.trf.xlu0
    %v2150 = vpop.trf.xlu0
    %v2151 = vpop.trf.xlu0
    %v2152 = vpop.trf.xlu0
    %2153 = vxpose.xlu0.b32.start [1/16] %v1750, 128
    %2154 = vxpose.xlu0.b32.cont [2/16] 0.0, 128
    %2155 = vxpose.xlu0.b32.cont [3/16] 0.0, 128
    %2156 = vxpose.xlu0.b32.cont [4/16] 0.0, 128
    %2157 = vxpose.xlu0.b32.cont [5/16] 0.0, 128
    %2158 = vxpose.xlu0.b32.cont [6/16] 0.0, 128
    %2159 = vxpose.xlu0.b32.cont [7/16] 0.0, 128
    %2160 = vxpose.xlu0.b32.cont [8/16] 0.0, 128
    %2161 = vxpose.xlu0.b32.cont [9/16] 0.0, 128
    %2162 = vxpose.xlu0.b32.cont [10/16] 0.0, 128
    %2163 = vxpose.xlu0.b32.cont [11/16] 0.0, 128
    %2164 = vxpose.xlu0.b32.cont [12/16] 0.0, 128
    %2165 = vxpose.xlu0.b32.cont [13/16] 0.0, 128
    %2166 = vxpose.xlu0.b32.cont [14/16] 0.0, 128
    %2167 = vxpose.xlu0.b32.cont [15/16] 0.0, 128
    %2168 = vxpose.xlu0.b32.end [16/16] 0.0, 128
    %v2169 = vpop.trf.xlu0
    %v2170 = vpop.trf.xlu0
    %v2171 = vpop.trf.xlu0
    %v2172 = vpop.trf.xlu0
    %v2173 = vpop.trf.xlu0
    %v2174 = vpop.trf.xlu0
    %v2175 = vpop.trf.xlu0
    %v2176 = vpop.trf.xlu0
    %v2177 = vpop.trf.xlu0
    %v2178 = vpop.trf.xlu0
    %v2179 = vpop.trf.xlu0
    %v2180 = vpop.trf.xlu0
    %v2181 = vpop.trf.xlu0
    %v2182 = vpop.trf.xlu0
    %v2183 = vpop.trf.xlu0
    %v2184 = vpop.trf.xlu0
    %2185 = vxpose.xlu0.b32.start [1/16] %v1826, 128
    %2186 = vxpose.xlu0.b32.cont [2/16] 0.0, 128
    %2187 = vxpose.xlu0.b32.cont [3/16] 0.0, 128
    %2188 = vxpose.xlu0.b32.cont [4/16] 0.0, 128
    %2189 = vxpose.xlu0.b32.cont [5/16] 0.0, 128
    %2190 = vxpose.xlu0.b32.cont [6/16] 0.0, 128
    %2191 = vxpose.xlu0.b32.cont [7/16] 0.0, 128
    %2192 = vxpose.xlu0.b32.cont [8/16] 0.0, 128
    %2193 = vxpose.xlu0.b32.cont [9/16] 0.0, 128
    %2194 = vxpose.xlu0.b32.cont [10/16] 0.0, 128
    %2195 = vxpose.xlu0.b32.cont [11/16] 0.0, 128
    %2196 = vxpose.xlu0.b32.cont [12/16] 0.0, 128
    %2197 = vxpose.xlu0.b32.cont [13/16] 0.0, 128
    %2198 = vxpose.xlu0.b32.cont [14/16] 0.0, 128
    %2199 = vxpose.xlu0.b32.cont [15/16] 0.0, 128
    %2200 = vxpose.xlu0.b32.end [16/16] 0.0, 128
    %v2201 = vpop.trf.xlu0
    %v2202 = vpop.trf.xlu0
    %v2203 = vpop.trf.xlu0
    %v2204 = vpop.trf.xlu0
    %v2205 = vpop.trf.xlu0
    %v2206 = vpop.trf.xlu0
    %v2207 = vpop.trf.xlu0
    %v2208 = vpop.trf.xlu0
    %v2209 = vpop.trf.xlu0
    %v2210 = vpop.trf.xlu0
    %v2211 = vpop.trf.xlu0
    %v2212 = vpop.trf.xlu0
    %v2213 = vpop.trf.xlu0
    %v2214 = vpop.trf.xlu0
    %v2215 = vpop.trf.xlu0
    %v2216 = vpop.trf.xlu0
    %2217 = vxpose.xlu0.b32.start [1/16] %v1902, 128
    %2218 = vxpose.xlu0.b32.cont [2/16] 0.0, 128
    %2219 = vxpose.xlu0.b32.cont [3/16] 0.0, 128
    %2220 = vxpose.xlu0.b32.cont [4/16] 0.0, 128
    %2221 = vxpose.xlu0.b32.cont [5/16] 0.0, 128
    %2222 = vxpose.xlu0.b32.cont [6/16] 0.0, 128
    %2223 = vxpose.xlu0.b32.cont [7/16] 0.0, 128
    %2224 = vxpose.xlu0.b32.cont [8/16] 0.0, 128
    %2225 = vxpose.xlu0.b32.cont [9/16] 0.0, 128
    %2226 = vxpose.xlu0.b32.cont [10/16] 0.0, 128
    %2227 = vxpose.xlu0.b32.cont [11/16] 0.0, 128
    %2228 = vxpose.xlu0.b32.cont [12/16] 0.0, 128
    %2229 = vxpose.xlu0.b32.cont [13/16] 0.0, 128
    %2230 = vxpose.xlu0.b32.cont [14/16] 0.0, 128
    %2231 = vxpose.xlu0.b32.cont [15/16] 0.0, 128
    %2232 = vxpose.xlu0.b32.end [16/16] 0.0, 128
    %v2233 = vpop.trf.xlu0
    %v2234 = vpop.trf.xlu0
    %v2235 = vpop.trf.xlu0
    %v2236 = vpop.trf.xlu0
    %v2237 = vpop.trf.xlu0
    %v2238 = vpop.trf.xlu0
    %v2239 = vpop.trf.xlu0
    %v2240 = vpop.trf.xlu0
    %v2241 = vpop.trf.xlu0
    %v2242 = vpop.trf.xlu0
    %v2243 = vpop.trf.xlu0
    %v2244 = vpop.trf.xlu0
    %v2245 = vpop.trf.xlu0
    %v2246 = vpop.trf.xlu0
    %v2247 = vpop.trf.xlu0
    %v2248 = vpop.trf.xlu0
    %2249 = vxpose.xlu0.b32.start [1/16] %v1978, 128
    %2250 = vxpose.xlu0.b32.cont [2/16] 0.0, 128
    %2251 = vxpose.xlu0.b32.cont [3/16] 0.0, 128
    %2252 = vxpose.xlu0.b32.cont [4/16] 0.0, 128
    %2253 = vxpose.xlu0.b32.cont [5/16] 0.0, 128
    %2254 = vxpose.xlu0.b32.cont [6/16] 0.0, 128
    %2255 = vxpose.xlu0.b32.cont [7/16] 0.0, 128
    %2256 = vxpose.xlu0.b32.cont [8/16] 0.0, 128
    %2257 = vxpose.xlu0.b32.cont [9/16] 0.0, 128
    %2258 = vxpose.xlu0.b32.cont [10/16] 0.0, 128
    %2259 = vxpose.xlu0.b32.cont [11/16] 0.0, 128
    %2260 = vxpose.xlu0.b32.cont [12/16] 0.0, 128
    %2261 = vxpose.xlu0.b32.cont [13/16] 0.0, 128
    %2262 = vxpose.xlu0.b32.cont [14/16] 0.0, 128
    %2263 = vxpose.xlu0.b32.cont [15/16] 0.0, 128
    %2264 = vxpose.xlu0.b32.end [16/16] 0.0, 128
    %v2265 = vpop.trf.xlu0
    %v2266 = vpop.trf.xlu0
    %v2267 = vpop.trf.xlu0
    %v2268 = vpop.trf.xlu0
    %v2269 = vpop.trf.xlu0
    %v2270 = vpop.trf.xlu0
    %v2271 = vpop.trf.xlu0
    %v2272 = vpop.trf.xlu0
    %v2273 = vpop.trf.xlu0
    %v2274 = vpop.trf.xlu0
    %v2275 = vpop.trf.xlu0
    %v2276 = vpop.trf.xlu0
    %v2277 = vpop.trf.xlu0
    %v2278 = vpop.trf.xlu0
    %v2279 = vpop.trf.xlu0
    %v2280 = vpop.trf.xlu0
    %2281 = vxpose.xlu0.b32.start [1/16] %v2054, 128
    %2282 = vxpose.xlu0.b32.cont [2/16] 0.0, 128
    %2283 = vxpose.xlu0.b32.cont [3/16] 0.0, 128
    %2284 = vxpose.xlu0.b32.cont [4/16] 0.0, 128
    %2285 = vxpose.xlu0.b32.cont [5/16] 0.0, 128
    %2286 = vxpose.xlu0.b32.cont [6/16] 0.0, 128
    %2287 = vxpose.xlu0.b32.cont [7/16] 0.0, 128
    %2288 = vxpose.xlu0.b32.cont [8/16] 0.0, 128
    %2289 = vxpose.xlu0.b32.cont [9/16] 0.0, 128
    %2290 = vxpose.xlu0.b32.cont [10/16] 0.0, 128
    %2291 = vxpose.xlu0.b32.cont [11/16] 0.0, 128
    %2292 = vxpose.xlu0.b32.cont [12/16] 0.0, 128
    %2293 = vxpose.xlu0.b32.cont [13/16] 0.0, 128
    %2294 = vxpose.xlu0.b32.cont [14/16] 0.0, 128
    %2295 = vxpose.xlu0.b32.cont [15/16] 0.0, 128
    %2296 = vxpose.xlu0.b32.end [16/16] 0.0, 128
    %v2297 = vpop.trf.xlu0
    %v2298 = vpop.trf.xlu0
    %v2299 = vpop.trf.xlu0
    %v2300 = vpop.trf.xlu0
    %v2301 = vpop.trf.xlu0
    %v2302 = vpop.trf.xlu0
    %v2303 = vpop.trf.xlu0
    %v2304 = vpop.trf.xlu0
    %v2305 = vpop.trf.xlu0
    %v2306 = vpop.trf.xlu0
    %v2307 = vpop.trf.xlu0
    %v2308 = vpop.trf.xlu0
    %v2309 = vpop.trf.xlu0
    %v2310 = vpop.trf.xlu0
    %v2311 = vpop.trf.xlu0
    %v2312 = vpop.trf.xlu0
    %2313 = vxpose.xlu0.b32.start [1/16] %v2073, 128
    %2314 = vxpose.xlu0.b32.cont [2/16] %v2105, 128
    %2315 = vxpose.xlu0.b32.cont [3/16] %v2137, 128
    %2316 = vxpose.xlu0.b32.cont [4/16] %v2169, 128
    %2317 = vxpose.xlu0.b32.cont [5/16] 0.0, 128
    %2318 = vxpose.xlu0.b32.cont [6/16] 0.0, 128
    %2319 = vxpose.xlu0.b32.cont [7/16] 0.0, 128
    %2320 = vxpose.xlu0.b32.cont [8/16] 0.0, 128
    %2321 = vxpose.xlu0.b32.cont [9/16] 0.0, 128
    %2322 = vxpose.xlu0.b32.cont [10/16] 0.0, 128
    %2323 = vxpose.xlu0.b32.cont [11/16] 0.0, 128
    %2324 = vxpose.xlu0.b32.cont [12/16] 0.0, 128
    %2325 = vxpose.xlu0.b32.cont [13/16] 0.0, 128
    %2326 = vxpose.xlu0.b32.cont [14/16] 0.0, 128
    %2327 = vxpose.xlu0.b32.cont [15/16] 0.0, 128
    %2328 = vxpose.xlu0.b32.end [16/16] 0.0, 128
    %v2329 = vpop.trf.xlu0
    %v2330 = vpop.trf.xlu0
    %v2331 = vpop.trf.xlu0
    %v2332 = vpop.trf.xlu0
    %v2333 = vpop.trf.xlu0
    %v2334 = vpop.trf.xlu0
    %v2335 = vpop.trf.xlu0
    %v2336 = vpop.trf.xlu0
    %v2337 = vpop.trf.xlu0
    %v2338 = vpop.trf.xlu0
    %v2339 = vpop.trf.xlu0
    %v2340 = vpop.trf.xlu0
    %v2341 = vpop.trf.xlu0
    %v2342 = vpop.trf.xlu0
    %v2343 = vpop.trf.xlu0
    %v2344 = vpop.trf.xlu0
    %2345 = vxpose.xlu0.b32.start [1/16] %v2201, 128
    %2346 = vxpose.xlu0.b32.cont [2/16] %v2233, 128
    %2347 = vxpose.xlu0.b32.cont [3/16] %v2265, 128
    %2348 = vxpose.xlu0.b32.cont [4/16] %v2297, 128
    %2349 = vxpose.xlu0.b32.cont [5/16] 0.0, 128
    %2350 = vxpose.xlu0.b32.cont [6/16] 0.0, 128
    %2351 = vxpose.xlu0.b32.cont [7/16] 0.0, 128
    %2352 = vxpose.xlu0.b32.cont [8/16] 0.0, 128
    %2353 = vxpose.xlu0.b32.cont [9/16] 0.0, 128
    %2354 = vxpose.xlu0.b32.cont [10/16] 0.0, 128
    %2355 = vxpose.xlu0.b32.cont [11/16] 0.0, 128
    %2356 = vxpose.xlu0.b32.cont [12/16] 0.0, 128
    %2357 = vxpose.xlu0.b32.cont [13/16] 0.0, 128
    %2358 = vxpose.xlu0.b32.cont [14/16] 0.0, 128
    %2359 = vxpose.xlu0.b32.cont [15/16] 0.0, 128
    %2360 = vxpose.xlu0.b32.end [16/16] 0.0, 128
    %v2361 = vpop.trf.xlu0
    %v2362 = vpop.trf.xlu0
    %v2363 = vpop.trf.xlu0
    %v2364 = vpop.trf.xlu0
    %v2365 = vpop.trf.xlu0
    %v2366 = vpop.trf.xlu0
    %v2367 = vpop.trf.xlu0
    %v2368 = vpop.trf.xlu0
    %v2369 = vpop.trf.xlu0
    %v2370 = vpop.trf.xlu0
    %v2371 = vpop.trf.xlu0
    %v2372 = vpop.trf.xlu0
    %v2373 = vpop.trf.xlu0
    %v2374 = vpop.trf.xlu0
    %v2375 = vpop.trf.xlu0
    %v2376 = vpop.trf.xlu0
    %v2377 = vld [vmem:[#allocation11] sm:$0xff]
    %v2378 = vld [vmem:[#allocation11 + $0x8] sm:$0xff]
    %v2379 = vld [vmem:[#allocation11 + $0x10] sm:$0xff]
    %v2380 = vld [vmem:[#allocation11 + $0x18] sm:$0xff]
    %v2381 = vld [vmem:[%s7] sm:$0x1]
    %v2383 = vlaneseq
    %v2384 = vshrl.u32 %v2383, 7
    %v2385 = vsub.s32 0, %v2384
    %v2386 = vrot.slane %v2381, %v2385
    %v2389 = vsel %vm147, %v2329, 0
    %v2392 = vsel %vm147, %v2361, 0
    %2394 = vmatprep.subr.mxu0 0.0
    %2395 = vmatpush1.msra.mxu0 0.0
    %2396 = vmatprep.subr.mxu0 0.0
    %2397 = vmatpush1.msra.mxu0 0.0
    %2398 = vmatprep.subr.mxu0 0.0
    %2399 = vmatpush1.msra.mxu0 0.0
    %2400 = vmatprep.subr.mxu0 0.0
    %2401 = vmatpush1.msra.mxu0 0.0
    %2402 = vmatprep.subr.mxu0 0.0
    %2403 = vmatpush1.msra.mxu0 0.0
    %2404 = vmatprep.subr.mxu0 0.0
    %2405 = vmatpush1.msra.mxu0 0.0
    %2406 = vmatprep.subr.mxu0 0.0
    %2407 = vmatpush1.msra.mxu0 0.0
    %2408 = vmatprep.subr.mxu0 0.0
    %2409 = vmatpush1.msra.mxu0 0.0
    %2410 = vmatprep.subr.mxu0 0.0
    %2411 = vmatpush1.msra.mxu0 0.0
    %2412 = vmatprep.subr.mxu0 0.0
    %2413 = vmatpush1.msra.mxu0 0.0
    %2414 = vmatprep.subr.mxu0 0.0
    %2415 = vmatpush1.msra.mxu0 0.0
    %2416 = vmatprep.subr.mxu0 0.0
    %2417 = vmatpush1.msra.mxu0 0.0
    %2418 = vmatprep.subr.mxu0 0.0
    %2419 = vmatpush1.msra.mxu0 %v2380
    %2420 = vmatprep.subr.mxu0 0.0
    %2421 = vmatpush1.msra.mxu0 %v2379
    %2422 = vmatprep.subr.mxu0 0.0
    %2423 = vmatpush1.msra.mxu0 %v2378
    %2424 = vmatprep.subr.mxu0 0.0
    %2425 = vmatpush1.msra.mxu0 %v2377
    %2426 = vmatprep.subr.mxu0 0.0
    %2427 = vmatpush2.msra.mxu0 0.0
    %2428 = vmatprep.subr.mxu0 0.0
    %2429 = vmatpush2.msra.mxu0 0.0
    %2430 = vmatprep.subr.mxu0 0.0
    %2431 = vmatpush2.msra.mxu0 0.0
    %2432 = vmatprep.subr.mxu0 0.0
    %2433 = vmatpush2.msra.mxu0 0.0
    %2434 = vmatprep.subr.mxu0 0.0
    %2435 = vmatpush2.msra.mxu0 0.0
    %2436 = vmatprep.subr.mxu0 0.0
    %2437 = vmatpush2.msra.mxu0 0.0
    %2438 = vmatprep.subr.mxu0 0.0
    %2439 = vmatpush2.msra.mxu0 0.0
    %2440 = vmatprep.subr.mxu0 0.0
    %2441 = vmatpush2.msra.mxu0 0.0
    %2442 = vmatprep.subr.mxu0 0.0
    %2443 = vmatpush2.msra.mxu0 0.0
    %2444 = vmatprep.subr.mxu0 0.0
    %2445 = vmatpush2.msra.mxu0 0.0
    %2446 = vmatprep.subr.mxu0 0.0
    %2447 = vmatpush2.msra.mxu0 0.0
    %2448 = vmatprep.subr.mxu0 0.0
    %2449 = vmatpush2.msra.mxu0 0.0
    %2450 = vmatprep.subr.mxu0 0.0
    %2451 = vmatpush2.msra.mxu0 0.0
    %2452 = vmatprep.subr.mxu0 0.0
    %2453 = vmatpush2.msra.mxu0 0.0
    %2454 = vmatprep.subr.mxu0 0.0
    %2455 = vmatpush2.msra.mxu0 0.0
    %2456 = vmatprep.subr.mxu0 0.0
    %2457 = vmatpush2.msra.mxu0 0.0
    %2458 = vmatprep.mubr.f32.mxu0 0.0
    %2459 = vmatmul.mubr.f32.gmra.mxu0 %v2389
    %v2460 = vpop.f32.mrf.mxu0
    %v2461 = vadd.f32 %v2386, %v2460
    %v2462 = vpop.f32.mrf.mxu0
    %2463 = vmatprep.mubr.f32.mxu0 0.0
    %2464 = vmatmul.mubr.f32.gmra.mxu0 %v2392
    %v2465 = vpop.f32.mrf.mxu0
    %v2466 = vadd.f32 %v2386, %v2465
    %v2467 = vpop.f32.mrf.mxu0
    %2468 = vdwg.mxu0
    %v2469 = vadd.f32 %v118, %v2461
    %v2470 = vadd.f32 %v119, %v2466
    %v2471 = vsel %vm147, %v2469, 0.0
    %2472 = vadd.xlane.f32.xlu0 %v2471
    %v2473 = vpop.xlane.xlu0 %2472
    %v2474 = vsel %vm147, %v2470, 0.0
    %2475 = vadd.xlane.f32.xlu0 %v2474
    %v2476 = vpop.xlane.xlu0 %2475
    %v2477 = vrcp.pop 32.0
    %v2478 = vmul.f32 %v2473, %v2477
    %v2479 = vmul.f32 %v2476, %v2477
    %v2480 = vsub.f32 %v2469, %v2478
    %v2481 = vsub.f32 %v2470, %v2479
    %v2482 = vmul.f32 %v2480, %v2480
    %v2483 = vmul.f32 %v2481, %v2481
    %v2484 = vsel %vm147, %v2482, 0.0
    %2485 = vadd.xlane.f32.xlu0 %v2484
    %v2486 = vpop.xlane.xlu0 %2485
    %v2487 = vsel %vm147, %v2483, 0.0
    %2488 = vadd.xlane.f32.xlu0 %v2487
    %v2489 = vpop.xlane.xlu0 %2488
    %v2490 = vmul.f32 %v2486, %v2477
    %v2491 = vmul.f32 %v2489, %v2477
    %v2492 = vadd.f32 %v2490, 1e-05
    %v2493 = vadd.f32 %v2491, 1e-05
    %v2494 = vrsqrt.pop %v2492
    %v2495 = vrsqrt.pop %v2493
    %v2496 = vmul.f32 %v2480, %v2494
    %v2497 = vmul.f32 %v2481, %v2495
    %v2498 = vld [vmem:[%s8] sm:$0x1]
    %v2500 = vlaneseq
    %v2501 = vshrl.u32 %v2500, 7
    %v2502 = vsub.s32 0, %v2501
    %v2503 = vrot.slane %v2498, %v2502
    %v2505 = vmul.f32 %v2496, %v2503
    %v2506 = vmul.f32 %v2497, %v2503
    %v2507 = vld [vmem:[%s9] sm:$0x1]
    %v2509 = vlaneseq
    %v2510 = vshrl.u32 %v2509, 7
    %v2511 = vsub.s32 0, %v2510
    %v2512 = vrot.slane %v2507, %v2511
    %v2514 = vadd.f32 %v2505, %v2512
    %v2515 = vadd.f32 %v2506, %v2512
    %2516 = vst.msk [vmem:[#allocation13] sm:$0xff] %vm147, %v2514
    %2517 = vst.msk [vmem:[#allocation13 + $0x8] sm:$0xff] %vm147, %v2515
    // Predicated region
    $region66: #{tpu_custom_call.1} parent=1 // pred_check
      _
    $region67: #{tpu_custom_call.1} parent=1 // pred_check_branch
      %2519 = sbr.rel (0) target = $region69
    $region68: #{tpu_custom_call.1} parent=1 // pred_region
      %s2521 = ssub.s32 256, 256
      %2522 = vsyncadd [#allocation4], %s2521
      %s2523 = sshll.u32 [#allocation13], 4
      %s2524 = int_to_ptr.vmem [resolvable:$true] %s2523
      %2529 = dma.vmem_to_hbm [thread:$0]  %s2524, 256, %s10, [#allocation4], 128, 128, 8
    $region69: #{tpu_custom_call.1} parent=1 // pred_fallthru
      _
    // Predicated region
    $region70: #{tpu_custom_call.1} parent=1 // pred_check
      _
    $region71: #{tpu_custom_call.1} parent=1 // pred_check_branch
      %2531 = sbr.rel (0) target = $region73
    $region72: #{tpu_custom_call.1} parent=1 // pred_region
      %2532 = dma.done [#allocation4], 256
    $region73: #{tpu_custom_call.1} parent=1 // pred_fallthru
      _
    %2533 = vsyncpa [#allocation3], 1
    %2534 = vsyncpa [#allocation6], 1
    %2535 = vsyncpa [#allocation9], 1
    %2536 = vsyncpa [#allocation12], 1
    %2537 = vsyncpa [#allocation4], 1

</llo_original>
